<compile_context>
chip_gen: v7x
topology: tpu7x:2x2x1
jax: 0.10.0
libtpu: 0.0.40
codegen_flags: <defaults>
</compile_context>

<pallas_src>
import jax
import jax.numpy as jnp
from jax import lax
from jax.experimental import pallas as pl
from jax.experimental.pallas import tpu as pltpu


def _round_up(x: int, m: int) -> int:
    return (x + m - 1) // m * m


def _gru_kernel(emb_ref, wih_ref, whh_ref, bi_ref, bhn_ref, h0_ref,
                out_ref, hN_ref, gi_ref):
    """Full GRU forward in one kernel invocation.

    Ref shapes (all VMEM-resident, padded; Bp % 8 == 0, Hp % 128 == 0):
      emb_ref : (S*Bp, Hp)   bf16   embedded tokens, time-major, flattened
      wih_ref : (Hp, 3*Hp)   bf16   W_ih^T, gate-blocked (r | z | n), zero-padded
      whh_ref : (Hp, 3*Hp)   bf16   W_hh^T, gate-blocked, zero-padded
      bi_ref  : (1, 3*Hp)    f32    b_ih with b_hr, b_hz folded in
      bhn_ref : (1, Hp)      f32    b_hn (n-gate recurrent bias only)
      h0_ref  : (Bp, Hp)     f32
      out_ref : (S*Bp, Hp)   f32    per-step hidden states
      hN_ref  : (Bp, Hp)     f32    final hidden state
      gi_ref  : (S*Bp, 3*Hp) f32    scratch: hoisted input projection
    """
    Bp, Hp = h0_ref.shape
    S = emb_ref.shape[0] // Bp

    # ---- Phase 1: hoisted input projection -- one big MXU matmul, bias folded.
    gi_ref[...] = (
        jnp.dot(emb_ref[...], wih_ref[...], preferred_element_type=jnp.float32)
        + bi_ref[...]
    )

    whh = whh_ref[...]            # (Hp, 3Hp) bf16, resident across the loop
    bhn = bhn_ref[...]            # (1, Hp) f32

    # ---- Phase 2: sequential recurrence; only gh = h @ W_hh^T stays serial.
    def step(t, h):
        row = pl.multiple_of(t * Bp, Bp)              # sublane-aligned offset
        gi_t = gi_ref[pl.ds(row, Bp), :]              # (Bp, 3Hp) f32
        gh = jnp.dot(h.astype(whh.dtype), whh,
                     preferred_element_type=jnp.float32)

        # Gate slices fall on 128-lane boundaries: free views, no relayout.
        i_r, i_z, i_n = gi_t[:, :Hp], gi_t[:, Hp:2 * Hp], gi_t[:, 2 * Hp:]
        h_r, h_z = gh[:, :Hp], gh[:, Hp:2 * Hp]
        h_n = gh[:, 2 * Hp:] + bhn                    # only n-gate needs b_hh

        r = jax.nn.sigmoid(i_r + h_r)                 # EUP
        z = jax.nn.sigmoid(i_z + h_z)                 # EUP
        n = jnp.tanh(i_n + r * h_n)                   # EUP (b_hn inside r*(.))
        h_new = n + z * (h - n)                       # == (1-z)*n + z*h

        out_ref[pl.ds(row, Bp), :] = h_new            # lane-dense full-width store
        return h_new

    h_final = lax.fori_loop(0, S, step, h0_ref[...], unroll=(S <= 16))
    hN_ref[...] = h_final


def gru_forward_pallas(embedded, w_ih, w_hh, b_ih, b_hh, h0,
                       *, mxu_dtype=jnp.bfloat16):
    """embedded: (S, B, H) f32; weights in PyTorch nn.GRU layout (3H, H)/(3H,)."""
    S, B, H = embedded.shape
    Bp = _round_up(B, 8)          # sublane multiple
    Hp = _round_up(H, 128)        # lane multiple
    f32 = jnp.float32

    def pack_weight(w):           # (3H, H) -> (Hp, 3Hp): W^T, gate-blocked, zero-padded
        w_t = jnp.transpose(w).astype(f32)            # (H, 3H)
        out = jnp.zeros((Hp, 3 * Hp), f32)
        for g in range(3):
            out = out.at[:H, g * Hp:g * Hp + H].set(w_t[:, g * H:(g + 1) * H])
        return out.astype(mxu_dtype)

    def pack_bias3(b):            # (3H,) -> (1, 3Hp), gate-blocked
        out = jnp.zeros((1, 3 * Hp), f32)
        for g in range(3):
            out = out.at[0, g * Hp:g * Hp + H].set(b[g * H:(g + 1) * H])
        return out

    wih_p = pack_weight(w_ih)
    whh_p = pack_weight(w_hh)

    # Fold b_hr, b_hz into the hoisted input-projection bias; keep only b_hn
    # for the serial loop (it must stay inside r * (.)).
    b_fold = jnp.concatenate([b_ih[:2 * H] + b_hh[:2 * H], b_ih[2 * H:]])
    bi_p = pack_bias3(b_fold)                                  # (1, 3Hp)
    bhn_p = jnp.zeros((1, Hp), f32).at[0, :H].set(b_hh[2 * H:])  # (1, Hp)

    emb_p = jnp.zeros((S, Bp, Hp), f32).at[:, :B, :H].set(embedded.astype(f32))
    emb_flat = emb_p.reshape(S * Bp, Hp).astype(mxu_dtype)

    h0_p = jnp.zeros((Bp, Hp), f32).at[:B, :H].set(h0.astype(f32))

    # TODO(synk): for very long sequences the (S*Bp)-row gi / out slabs should
    # be streamed with a manual double-buffered DMA instead of held in VMEM.
    vmem = pltpu.MemorySpace.VMEM
    out_flat, h_last = pl.pallas_call(
        _gru_kernel,
        out_shape=(
            jax.ShapeDtypeStruct((S * Bp, Hp), f32),
            jax.ShapeDtypeStruct((Bp, Hp), f32),
        ),
        in_specs=[pl.BlockSpec(memory_space=vmem)] * 6,
        out_specs=(pl.BlockSpec(memory_space=vmem),
                   pl.BlockSpec(memory_space=vmem)),
        scratch_shapes=[pltpu.VMEM((S * Bp, 3 * Hp), f32)],
        compiler_params=pltpu.CompilerParams(vmem_limit_bytes=64 << 20),
    )(emb_flat, wih_p, whh_p, bi_p, bhn_p, h0_p)

    outputs = out_flat.reshape(S, Bp, Hp)[:, :B, :H]
    h_final = h_last[:B, :H]
    return outputs, h_final


def gru_sentiment_forward(input_seq, emb_table, w_ih, w_hh, b_ih, b_hh,
                          hidden=None):
    """Mirrors GRUSentiment.forward.

    input_seq: (S, B) int32 token ids.
    Returns (outputs, hidden) with outputs (S, B, H), hidden (1, B, H).
    """
    S, B = input_seq.shape
    H = w_hh.shape[1]

    # Embedding lookup (glue; XLA gather).
    embedded = jnp.take(emb_table, input_seq, axis=0)        # (S, B, H)

    if hidden is None:
        h0 = jnp.zeros((B, H), dtype=jnp.float32)            # nn.GRU default h0
    else:
        h0 = hidden.reshape(B, H).astype(jnp.float32)

    outputs, h_final = gru_forward_pallas(embedded, w_ih, w_hh, b_ih, b_hh, h0)

    # TODO(synk): torch.nn.utils.rnn.pad_packed_sequence is skipped -- input is
    # treated as an already-padded dense (S, B) tensor, not a PackedSequence.
    # TODO(synk): outputs[:, :, :H] + outputs[:, :, H:] -- the GRU is
    # unidirectional so the second slice is empty; the sum is the identity on
    # the first H channels, which is what we return.
    outputs = outputs[:, :, :H]

    hidden_out = h_final.reshape(1, B, H)                    # (n_layers, B, H)
    return outputs, hidden_out


def gru_reference(embedded, w_ih, w_hh, b_ih, b_hh, h0):
    """Pure-JAX f32 reference matching PyTorch nn.GRU semantics."""
    S, B, H = embedded.shape

    def step(h, x):
        gi = x @ w_ih.T + b_ih
        gh = h @ w_hh.T + b_hh
        i_r, i_z, i_n = gi[:, :H], gi[:, H:2 * H], gi[:, 2 * H:]
        h_r, h_z, h_n = gh[:, :H], gh[:, H:2 * H], gh[:, 2 * H:]
        r = jax.nn.sigmoid(i_r + h_r)
        z = jax.nn.sigmoid(i_z + h_z)
        n = jnp.tanh(i_n + r * h_n)
        h_new = (1.0 - z) * n + z * h
        return h_new, h_new

    h_final, outs = lax.scan(step, h0, embedded)
    return outs, h_final


if __name__ == "__main__":
    # Small, deterministic example shapes.
    seq_len = 8
    batch = 2
    hidden_size = 32
    vocab_size = 50

    key = jax.random.PRNGKey(0)
    k_emb, k_wih, k_whh, k_bih, k_bhh, k_tok = jax.random.split(key, 6)

    # Deterministic synthetic parameters (shapes per nn.Embedding / nn.GRU).
    emb_table = jax.random.normal(k_emb, (vocab_size, hidden_size),
                                  dtype=jnp.float32) * 0.1
    w_ih = jax.random.normal(k_wih, (3 * hidden_size, hidden_size),
                             dtype=jnp.float32) * 0.1   # weight_ih_l0
    w_hh = jax.random.normal(k_whh, (3 * hidden_size, hidden_size),
                             dtype=jnp.float32) * 0.1   # weight_hh_l0
    b_ih = jax.random.normal(k_bih, (3 * hidden_size,), dtype=jnp.float32) * 0.1
    b_hh = jax.random.normal(k_bhh, (3 * hidden_size,), dtype=jnp.float32) * 0.1

    input_seq = jax.random.randint(k_tok, (seq_len, batch), 0, vocab_size,
                                   dtype=jnp.int32)

    outputs, hidden = gru_sentiment_forward(input_seq, emb_table,
                                            w_ih, w_hh, b_ih, b_hh)
    jax.block_until_ready((outputs, hidden))

    assert outputs.shape == (seq_len, batch, hidden_size)
    assert hidden.shape == (1, batch, hidden_size)
    assert bool(jnp.all(jnp.isfinite(outputs)))
    assert bool(jnp.all(jnp.isfinite(hidden)))

    # Pure-JAX reference check (bf16 MXU operands -> loose tolerance).
    embedded = jnp.take(emb_table, input_seq, axis=0)
    h0 = jnp.zeros((batch, hidden_size), jnp.float32)
    ref_out, ref_h = gru_reference(embedded, w_ih, w_hh, b_ih, b_hh, h0)
    max_err_o = float(jnp.max(jnp.abs(outputs - ref_out)))
    max_err_h = float(jnp.max(jnp.abs(hidden[0] - ref_h)))
    assert max_err_o < 5e-2 and max_err_h < 5e-2, (max_err_o, max_err_h)

    print("KERNEL_OK")
</pallas_src>

<mosaic_0001>
module attributes {stable_mosaic.version = 11 : i64} {
  func.func @_gru_kernel(%arg0: memref<64x128xbf16, #tpu.memory_space<vmem>>, %arg1: memref<128x384xbf16, #tpu.memory_space<vmem>>, %arg2: memref<128x384xbf16, #tpu.memory_space<vmem>>, %arg3: memref<1x384xf32, #tpu.memory_space<vmem>>, %arg4: memref<1x128xf32, #tpu.memory_space<vmem>>, %arg5: memref<8x128xf32, #tpu.memory_space<vmem>>, %arg6: memref<64x128xf32, #tpu.memory_space<vmem>>, %arg7: memref<8x128xf32, #tpu.memory_space<vmem>>, %arg8: memref<64x384xf32, #tpu.memory_space<vmem>>) attributes {dimension_semantics = [], scalar_prefetch = 0 : i64, scratch_operands = 1 : i64, tpu.core_type = #tpu.core_type<tc>} {
    %c0 = arith.constant 0 : index
    %c0_0 = arith.constant 0 : index
    %0 = vector.load %arg0[%c0, %c0_0] : memref<64x128xbf16, #tpu.memory_space<vmem>>, vector<64x128xbf16>
    %c0_1 = arith.constant 0 : index
    %c0_2 = arith.constant 0 : index
    %1 = vector.load %arg1[%c0_1, %c0_2] : memref<128x384xbf16, #tpu.memory_space<vmem>>, vector<128x384xbf16>
    %cst = arith.constant dense<0.000000e+00> : vector<64x384xf32>
    %2 = tpu.matmul %0, %1, %cst {dimension_numbers = #tpu.dot_dimension_numbers<[1], [0], [0], [1], [0, 0, 1, 1], [], []>} : vector<64x128xbf16>, vector<128x384xbf16>, vector<64x384xf32> -> vector<64x384xf32>
    %c0_3 = arith.constant 0 : index
    %c0_4 = arith.constant 0 : index
    %3 = vector.load %arg3[%c0_3, %c0_4] : memref<1x384xf32, #tpu.memory_space<vmem>>, vector<1x384xf32>
    %4 = vector.broadcast %3 : vector<1x384xf32> to vector<64x384xf32>
    %5 = arith.addf %2, %4 : vector<64x384xf32>
    %c0_5 = arith.constant 0 : index
    %c0_6 = arith.constant 0 : index
    %6 = vector.load %arg8[%c0_5, %c0_6] : memref<64x384xf32, #tpu.memory_space<vmem>>, vector<64x384xf32>
    tpu.vector_store %arg8[%c0_5, %c0_6], %5 {strides = array<i32>} : memref<64x384xf32, #tpu.memory_space<vmem>>, vector<64x384xf32>,
    %c0_7 = arith.constant 0 : index
    %c0_8 = arith.constant 0 : index
    %7 = vector.load %arg2[%c0_7, %c0_8] : memref<128x384xbf16, #tpu.memory_space<vmem>>, vector<128x384xbf16>
    %c0_9 = arith.constant 0 : index
    %c0_10 = arith.constant 0 : index
    %8 = vector.load %arg4[%c0_9, %c0_10] : memref<1x128xf32, #tpu.memory_space<vmem>>, vector<1x128xf32>
    %c0_11 = arith.constant 0 : index
    %c0_12 = arith.constant 0 : index
    %9 = vector.load %arg5[%c0_11, %c0_12] : memref<8x128xf32, #tpu.memory_space<vmem>>, vector<8x128xf32>
    %c0_i32 = arith.constant 0 : i32
    %c8_i32 = arith.constant 8 : i32
    %10 = arith.muli %c0_i32, %c8_i32 : i32
    %11 = tpu.assume_multiple %10, 8 : i32
    %12 = arith.index_cast %11 : i32 to index
    %c0_13 = arith.constant 0 : index
    %13 = vector.load %arg8[%12, %c0_13] : memref<64x384xf32, #tpu.memory_space<vmem>>, vector<8x384xf32>
    %14 = arith.truncf %9 : vector<8x128xf32> to vector<8x128xbf16>
    %cst_14 = arith.constant dense<0.000000e+00> : vector<8x384xf32>
    %15 = tpu.matmul %14, %7, %cst_14 {dimension_numbers = #tpu.dot_dimension_numbers<[1], [0], [0], [1], [0, 0, 1, 1], [], []>} : vector<8x128xbf16>, vector<128x384xbf16>, vector<8x384xf32> -> vector<8x384xf32>
    %16 = vector.extract_strided_slice %13 {offsets = [0, 0], sizes = [8, 128], strides = [1, 1]} : vector<8x384xf32> to vector<8x128xf32>
    %17 = vector.extract_strided_slice %13 {offsets = [0, 128], sizes = [8, 128], strides = [1, 1]} : vector<8x384xf32> to vector<8x128xf32>
    %18 = vector.extract_strided_slice %13 {offsets = [0, 256], sizes = [8, 128], strides = [1, 1]} : vector<8x384xf32> to vector<8x128xf32>
    %19 = vector.extract_strided_slice %15 {offsets = [0, 0], sizes = [8, 128], strides = [1, 1]} : vector<8x384xf32> to vector<8x128xf32>
    %20 = vector.extract_strided_slice %15 {offsets = [0, 128], sizes = [8, 128], strides = [1, 1]} : vector<8x384xf32> to vector<8x128xf32>
    %21 = vector.extract_strided_slice %15 {offsets = [0, 256], sizes = [8, 128], strides = [1, 1]} : vector<8x384xf32> to vector<8x128xf32>
    %22 = vector.broadcast %8 : vector<1x128xf32> to vector<8x128xf32>
    %23 = arith.addf %21, %22 : vector<8x128xf32>
    %24 = arith.addf %16, %19 : vector<8x128xf32>
    %25 = arith.negf %24 : vector<8x128xf32>
    %26 = math.exp %25 : vector<8x128xf32>
    %cst_15 = arith.constant 1.000000e+00 : f32
    %27 = vector.broadcast %cst_15 : f32 to vector<8x128xf32>
    %28 = arith.addf %27, %26 : vector<8x128xf32>
    %29 = arith.divf %27, %28 : vector<8x128xf32>
    %30 = arith.addf %17, %20 : vector<8x128xf32>
    %31 = arith.negf %30 : vector<8x128xf32>
    %32 = math.exp %31 : vector<8x128xf32>
    %cst_16 = arith.constant 1.000000e+00 : f32
    %33 = vector.broadcast %cst_16 : f32 to vector<8x128xf32>
    %34 = arith.addf %33, %32 : vector<8x128xf32>
    %35 = arith.divf %33, %34 : vector<8x128xf32>
    %36 = arith.mulf %29, %23 : vector<8x128xf32>
    %37 = arith.addf %18, %36 : vector<8x128xf32>
    %38 = math.tanh %37 : vector<8x128xf32>
    %39 = arith.subf %9, %38 : vector<8x128xf32>
    %40 = arith.mulf %35, %39 : vector<8x128xf32>
    %41 = arith.addf %38, %40 : vector<8x128xf32>
    %42 = arith.index_cast %11 : i32 to index
    %c0_17 = arith.constant 0 : index
    %43 = vector.load %arg6[%42, %c0_17] : memref<64x128xf32, #tpu.memory_space<vmem>>, vector<8x128xf32>
    tpu.vector_store %arg6[%42, %c0_17], %41 {strides = array<i32>} : memref<64x128xf32, #tpu.memory_space<vmem>>, vector<8x128xf32>,
    %c1_i32 = arith.constant 1 : i32
    %c8_i32_18 = arith.constant 8 : i32
    %44 = arith.muli %c1_i32, %c8_i32_18 : i32
    %45 = tpu.assume_multiple %44, 8 : i32
    %46 = arith.index_cast %45 : i32 to index
    %c0_19 = arith.constant 0 : index
    %47 = vector.load %arg8[%46, %c0_19] : memref<64x384xf32, #tpu.memory_space<vmem>>, vector<8x384xf32>
    %48 = arith.truncf %41 : vector<8x128xf32> to vector<8x128xbf16>
    %cst_20 = arith.constant dense<0.000000e+00> : vector<8x384xf32>
    %49 = tpu.matmul %48, %7, %cst_20 {dimension_numbers = #tpu.dot_dimension_numbers<[1], [0], [0], [1], [0, 0, 1, 1], [], []>} : vector<8x128xbf16>, vector<128x384xbf16>, vector<8x384xf32> -> vector<8x384xf32>
    %50 = vector.extract_strided_slice %47 {offsets = [0, 0], sizes = [8, 128], strides = [1, 1]} : vector<8x384xf32> to vector<8x128xf32>
    %51 = vector.extract_strided_slice %47 {offsets = [0, 128], sizes = [8, 128], strides = [1, 1]} : vector<8x384xf32> to vector<8x128xf32>
    %52 = vector.extract_strided_slice %47 {offsets = [0, 256], sizes = [8, 128], strides = [1, 1]} : vector<8x384xf32> to vector<8x128xf32>
    %53 = vector.extract_strided_slice %49 {offsets = [0, 0], sizes = [8, 128], strides = [1, 1]} : vector<8x384xf32> to vector<8x128xf32>
    %54 = vector.extract_strided_slice %49 {offsets = [0, 128], sizes = [8, 128], strides = [1, 1]} : vector<8x384xf32> to vector<8x128xf32>
    %55 = vector.extract_strided_slice %49 {offsets = [0, 256], sizes = [8, 128], strides = [1, 1]} : vector<8x384xf32> to vector<8x128xf32>
    %56 = vector.broadcast %8 : vector<1x128xf32> to vector<8x128xf32>
    %57 = arith.addf %55, %56 : vector<8x128xf32>
    %58 = arith.addf %50, %53 : vector<8x128xf32>
    %59 = arith.negf %58 : vector<8x128xf32>
    %60 = math.exp %59 : vector<8x128xf32>
    %cst_21 = arith.constant 1.000000e+00 : f32
    %61 = vector.broadcast %cst_21 : f32 to vector<8x128xf32>
    %62 = arith.addf %61, %60 : vector<8x128xf32>
    %63 = arith.divf %61, %62 : vector<8x128xf32>
    %64 = arith.addf %51, %54 : vector<8x128xf32>
    %65 = arith.negf %64 : vector<8x128xf32>
    %66 = math.exp %65 : vector<8x128xf32>
    %cst_22 = arith.constant 1.000000e+00 : f32
    %67 = vector.broadcast %cst_22 : f32 to vector<8x128xf32>
    %68 = arith.addf %67, %66 : vector<8x128xf32>
    %69 = arith.divf %67, %68 : vector<8x128xf32>
    %70 = arith.mulf %63, %57 : vector<8x128xf32>
    %71 = arith.addf %52, %70 : vector<8x128xf32>
    %72 = math.tanh %71 : vector<8x128xf32>
    %73 = arith.subf %41, %72 : vector<8x128xf32>
    %74 = arith.mulf %69, %73 : vector<8x128xf32>
    %75 = arith.addf %72, %74 : vector<8x128xf32>
    %76 = arith.index_cast %45 : i32 to index
    %c0_23 = arith.constant 0 : index
    %77 = vector.load %arg6[%76, %c0_23] : memref<64x128xf32, #tpu.memory_space<vmem>>, vector<8x128xf32>
    tpu.vector_store %arg6[%76, %c0_23], %75 {strides = array<i32>} : memref<64x128xf32, #tpu.memory_space<vmem>>, vector<8x128xf32>,
    %c2_i32 = arith.constant 2 : i32
    %c8_i32_24 = arith.constant 8 : i32
    %78 = arith.muli %c2_i32, %c8_i32_24 : i32
    %79 = tpu.assume_multiple %78, 8 : i32
    %80 = arith.index_cast %79 : i32 to index
    %c0_25 = arith.constant 0 : index
    %81 = vector.load %arg8[%80, %c0_25] : memref<64x384xf32, #tpu.memory_space<vmem>>, vector<8x384xf32>
    %82 = arith.truncf %75 : vector<8x128xf32> to vector<8x128xbf16>
    %cst_26 = arith.constant dense<0.000000e+00> : vector<8x384xf32>
    %83 = tpu.matmul %82, %7, %cst_26 {dimension_numbers = #tpu.dot_dimension_numbers<[1], [0], [0], [1], [0, 0, 1, 1], [], []>} : vector<8x128xbf16>, vector<128x384xbf16>, vector<8x384xf32> -> vector<8x384xf32>
    %84 = vector.extract_strided_slice %81 {offsets = [0, 0], sizes = [8, 128], strides = [1, 1]} : vector<8x384xf32> to vector<8x128xf32>
    %85 = vector.extract_strided_slice %81 {offsets = [0, 128], sizes = [8, 128], strides = [1, 1]} : vector<8x384xf32> to vector<8x128xf32>
    %86 = vector.extract_strided_slice %81 {offsets = [0, 256], sizes = [8, 128], strides = [1, 1]} : vector<8x384xf32> to vector<8x128xf32>
    %87 = vector.extract_strided_slice %83 {offsets = [0, 0], sizes = [8, 128], strides = [1, 1]} : vector<8x384xf32> to vector<8x128xf32>
    %88 = vector.extract_strided_slice %83 {offsets = [0, 128], sizes = [8, 128], strides = [1, 1]} : vector<8x384xf32> to vector<8x128xf32>
    %89 = vector.extract_strided_slice %83 {offsets = [0, 256], sizes = [8, 128], strides = [1, 1]} : vector<8x384xf32> to vector<8x128xf32>
    %90 = vector.broadcast %8 : vector<1x128xf32> to vector<8x128xf32>
    %91 = arith.addf %89, %90 : vector<8x128xf32>
    %92 = arith.addf %84, %87 : vector<8x128xf32>
    %93 = arith.negf %92 : vector<8x128xf32>
    %94 = math.exp %93 : vector<8x128xf32>
    %cst_27 = arith.constant 1.000000e+00 : f32
    %95 = vector.broadcast %cst_27 : f32 to vector<8x128xf32>
    %96 = arith.addf %95, %94 : vector<8x128xf32>
    %97 = arith.divf %95, %96 : vector<8x128xf32>
    %98 = arith.addf %85, %88 : vector<8x128xf32>
    %99 = arith.negf %98 : vector<8x128xf32>
    %100 = math.exp %99 : vector<8x128xf32>
    %cst_28 = arith.constant 1.000000e+00 : f32
    %101 = vector.broadcast %cst_28 : f32 to vector<8x128xf32>
    %102 = arith.addf %101, %100 : vector<8x128xf32>
    %103 = arith.divf %101, %102 : vector<8x128xf32>
    %104 = arith.mulf %97, %91 : vector<8x128xf32>
    %105 = arith.addf %86, %104 : vector<8x128xf32>
    %106 = math.tanh %105 : vector<8x128xf32>
    %107 = arith.subf %75, %106 : vector<8x128xf32>
    %108 = arith.mulf %103, %107 : vector<8x128xf32>
    %109 = arith.addf %106, %108 : vector<8x128xf32>
    %110 = arith.index_cast %79 : i32 to index
    %c0_29 = arith.constant 0 : index
    %111 = vector.load %arg6[%110, %c0_29] : memref<64x128xf32, #tpu.memory_space<vmem>>, vector<8x128xf32>
    tpu.vector_store %arg6[%110, %c0_29], %109 {strides = array<i32>} : memref<64x128xf32, #tpu.memory_space<vmem>>, vector<8x128xf32>,
    %c3_i32 = arith.constant 3 : i32
    %c8_i32_30 = arith.constant 8 : i32
    %112 = arith.muli %c3_i32, %c8_i32_30 : i32
    %113 = tpu.assume_multiple %112, 8 : i32
    %114 = arith.index_cast %113 : i32 to index
    %c0_31 = arith.constant 0 : index
    %115 = vector.load %arg8[%114, %c0_31] : memref<64x384xf32, #tpu.memory_space<vmem>>, vector<8x384xf32>
    %116 = arith.truncf %109 : vector<8x128xf32> to vector<8x128xbf16>
    %cst_32 = arith.constant dense<0.000000e+00> : vector<8x384xf32>
    %117 = tpu.matmul %116, %7, %cst_32 {dimension_numbers = #tpu.dot_dimension_numbers<[1], [0], [0], [1], [0, 0, 1, 1], [], []>} : vector<8x128xbf16>, vector<128x384xbf16>, vector<8x384xf32> -> vector<8x384xf32>
    %118 = vector.extract_strided_slice %115 {offsets = [0, 0], sizes = [8, 128], strides = [1, 1]} : vector<8x384xf32> to vector<8x128xf32>
    %119 = vector.extract_strided_slice %115 {offsets = [0, 128], sizes = [8, 128], strides = [1, 1]} : vector<8x384xf32> to vector<8x128xf32>
    %120 = vector.extract_strided_slice %115 {offsets = [0, 256], sizes = [8, 128], strides = [1, 1]} : vector<8x384xf32> to vector<8x128xf32>
    %121 = vector.extract_strided_slice %117 {offsets = [0, 0], sizes = [8, 128], strides = [1, 1]} : vector<8x384xf32> to vector<8x128xf32>
    %122 = vector.extract_strided_slice %117 {offsets = [0, 128], sizes = [8, 128], strides = [1, 1]} : vector<8x384xf32> to vector<8x128xf32>
    %123 = vector.extract_strided_slice %117 {offsets = [0, 256], sizes = [8, 128], strides = [1, 1]} : vector<8x384xf32> to vector<8x128xf32>
    %124 = vector.broadcast %8 : vector<1x128xf32> to vector<8x128xf32>
    %125 = arith.addf %123, %124 : vector<8x128xf32>
    %126 = arith.addf %118, %121 : vector<8x128xf32>
    %127 = arith.negf %126 : vector<8x128xf32>
    %128 = math.exp %127 : vector<8x128xf32>
    %cst_33 = arith.constant 1.000000e+00 : f32
    %129 = vector.broadcast %cst_33 : f32 to vector<8x128xf32>
    %130 = arith.addf %129, %128 : vector<8x128xf32>
    %131 = arith.divf %129, %130 : vector<8x128xf32>
    %132 = arith.addf %119, %122 : vector<8x128xf32>
    %133 = arith.negf %132 : vector<8x128xf32>
    %134 = math.exp %133 : vector<8x128xf32>
    %cst_34 = arith.constant 1.000000e+00 : f32
    %135 = vector.broadcast %cst_34 : f32 to vector<8x128xf32>
    %136 = arith.addf %135, %134 : vector<8x128xf32>
    %137 = arith.divf %135, %136 : vector<8x128xf32>
    %138 = arith.mulf %131, %125 : vector<8x128xf32>
    %139 = arith.addf %120, %138 : vector<8x128xf32>
    %140 = math.tanh %139 : vector<8x128xf32>
    %141 = arith.subf %109, %140 : vector<8x128xf32>
    %142 = arith.mulf %137, %141 : vector<8x128xf32>
    %143 = arith.addf %140, %142 : vector<8x128xf32>
    %144 = arith.index_cast %113 : i32 to index
    %c0_35 = arith.constant 0 : index
    %145 = vector.load %arg6[%144, %c0_35] : memref<64x128xf32, #tpu.memory_space<vmem>>, vector<8x128xf32>
    tpu.vector_store %arg6[%144, %c0_35], %143 {strides = array<i32>} : memref<64x128xf32, #tpu.memory_space<vmem>>, vector<8x128xf32>,
    %c4_i32 = arith.constant 4 : i32
    %c8_i32_36 = arith.constant 8 : i32
    %146 = arith.muli %c4_i32, %c8_i32_36 : i32
    %147 = tpu.assume_multiple %146, 8 : i32
    %148 = arith.index_cast %147 : i32 to index
    %c0_37 = arith.constant 0 : index
    %149 = vector.load %arg8[%148, %c0_37] : memref<64x384xf32, #tpu.memory_space<vmem>>, vector<8x384xf32>
    %150 = arith.truncf %143 : vector<8x128xf32> to vector<8x128xbf16>
    %cst_38 = arith.constant dense<0.000000e+00> : vector<8x384xf32>
    %151 = tpu.matmul %150, %7, %cst_38 {dimension_numbers = #tpu.dot_dimension_numbers<[1], [0], [0], [1], [0, 0, 1, 1], [], []>} : vector<8x128xbf16>, vector<128x384xbf16>, vector<8x384xf32> -> vector<8x384xf32>
    %152 = vector.extract_strided_slice %149 {offsets = [0, 0], sizes = [8, 128], strides = [1, 1]} : vector<8x384xf32> to vector<8x128xf32>
    %153 = vector.extract_strided_slice %149 {offsets = [0, 128], sizes = [8, 128], strides = [1, 1]} : vector<8x384xf32> to vector<8x128xf32>
    %154 = vector.extract_strided_slice %149 {offsets = [0, 256], sizes = [8, 128], strides = [1, 1]} : vector<8x384xf32> to vector<8x128xf32>
    %155 = vector.extract_strided_slice %151 {offsets = [0, 0], sizes = [8, 128], strides = [1, 1]} : vector<8x384xf32> to vector<8x128xf32>
    %156 = vector.extract_strided_slice %151 {offsets = [0, 128], sizes = [8, 128], strides = [1, 1]} : vector<8x384xf32> to vector<8x128xf32>
    %157 = vector.extract_strided_slice %151 {offsets = [0, 256], sizes = [8, 128], strides = [1, 1]} : vector<8x384xf32> to vector<8x128xf32>
    %158 = vector.broadcast %8 : vector<1x128xf32> to vector<8x128xf32>
    %159 = arith.addf %157, %158 : vector<8x128xf32>
    %160 = arith.addf %152, %155 : vector<8x128xf32>
    %161 = arith.negf %160 : vector<8x128xf32>
    %162 = math.exp %161 : vector<8x128xf32>
    %cst_39 = arith.constant 1.000000e+00 : f32
    %163 = vector.broadcast %cst_39 : f32 to vector<8x128xf32>
    %164 = arith.addf %163, %162 : vector<8x128xf32>
    %165 = arith.divf %163, %164 : vector<8x128xf32>
    %166 = arith.addf %153, %156 : vector<8x128xf32>
    %167 = arith.negf %166 : vector<8x128xf32>
    %168 = math.exp %167 : vector<8x128xf32>
    %cst_40 = arith.constant 1.000000e+00 : f32
    %169 = vector.broadcast %cst_40 : f32 to vector<8x128xf32>
    %170 = arith.addf %169, %168 : vector<8x128xf32>
    %171 = arith.divf %169, %170 : vector<8x128xf32>
    %172 = arith.mulf %165, %159 : vector<8x128xf32>
    %173 = arith.addf %154, %172 : vector<8x128xf32>
    %174 = math.tanh %173 : vector<8x128xf32>
    %175 = arith.subf %143, %174 : vector<8x128xf32>
    %176 = arith.mulf %171, %175 : vector<8x128xf32>
    %177 = arith.addf %174, %176 : vector<8x128xf32>
    %178 = arith.index_cast %147 : i32 to index
    %c0_41 = arith.constant 0 : index
    %179 = vector.load %arg6[%178, %c0_41] : memref<64x128xf32, #tpu.memory_space<vmem>>, vector<8x128xf32>
    tpu.vector_store %arg6[%178, %c0_41], %177 {strides = array<i32>} : memref<64x128xf32, #tpu.memory_space<vmem>>, vector<8x128xf32>,
    %c5_i32 = arith.constant 5 : i32
    %c8_i32_42 = arith.constant 8 : i32
    %180 = arith.muli %c5_i32, %c8_i32_42 : i32
    %181 = tpu.assume_multiple %180, 8 : i32
    %182 = arith.index_cast %181 : i32 to index
    %c0_43 = arith.constant 0 : index
    %183 = vector.load %arg8[%182, %c0_43] : memref<64x384xf32, #tpu.memory_space<vmem>>, vector<8x384xf32>
    %184 = arith.truncf %177 : vector<8x128xf32> to vector<8x128xbf16>
    %cst_44 = arith.constant dense<0.000000e+00> : vector<8x384xf32>
    %185 = tpu.matmul %184, %7, %cst_44 {dimension_numbers = #tpu.dot_dimension_numbers<[1], [0], [0], [1], [0, 0, 1, 1], [], []>} : vector<8x128xbf16>, vector<128x384xbf16>, vector<8x384xf32> -> vector<8x384xf32>
    %186 = vector.extract_strided_slice %183 {offsets = [0, 0], sizes = [8, 128], strides = [1, 1]} : vector<8x384xf32> to vector<8x128xf32>
    %187 = vector.extract_strided_slice %183 {offsets = [0, 128], sizes = [8, 128], strides = [1, 1]} : vector<8x384xf32> to vector<8x128xf32>
    %188 = vector.extract_strided_slice %183 {offsets = [0, 256], sizes = [8, 128], strides = [1, 1]} : vector<8x384xf32> to vector<8x128xf32>
    %189 = vector.extract_strided_slice %185 {offsets = [0, 0], sizes = [8, 128], strides = [1, 1]} : vector<8x384xf32> to vector<8x128xf32>
    %190 = vector.extract_strided_slice %185 {offsets = [0, 128], sizes = [8, 128], strides = [1, 1]} : vector<8x384xf32> to vector<8x128xf32>
    %191 = vector.extract_strided_slice %185 {offsets = [0, 256], sizes = [8, 128], strides = [1, 1]} : vector<8x384xf32> to vector<8x128xf32>
    %192 = vector.broadcast %8 : vector<1x128xf32> to vector<8x128xf32>
    %193 = arith.addf %191, %192 : vector<8x128xf32>
    %194 = arith.addf %186, %189 : vector<8x128xf32>
    %195 = arith.negf %194 : vector<8x128xf32>
    %196 = math.exp %195 : vector<8x128xf32>
    %cst_45 = arith.constant 1.000000e+00 : f32
    %197 = vector.broadcast %cst_45 : f32 to vector<8x128xf32>
    %198 = arith.addf %197, %196 : vector<8x128xf32>
    %199 = arith.divf %197, %198 : vector<8x128xf32>
    %200 = arith.addf %187, %190 : vector<8x128xf32>
    %201 = arith.negf %200 : vector<8x128xf32>
    %202 = math.exp %201 : vector<8x128xf32>
    %cst_46 = arith.constant 1.000000e+00 : f32
    %203 = vector.broadcast %cst_46 : f32 to vector<8x128xf32>
    %204 = arith.addf %203, %202 : vector<8x128xf32>
    %205 = arith.divf %203, %204 : vector<8x128xf32>
    %206 = arith.mulf %199, %193 : vector<8x128xf32>
    %207 = arith.addf %188, %206 : vector<8x128xf32>
    %208 = math.tanh %207 : vector<8x128xf32>
    %209 = arith.subf %177, %208 : vector<8x128xf32>
    %210 = arith.mulf %205, %209 : vector<8x128xf32>
    %211 = arith.addf %208, %210 : vector<8x128xf32>
    %212 = arith.index_cast %181 : i32 to index
    %c0_47 = arith.constant 0 : index
    %213 = vector.load %arg6[%212, %c0_47] : memref<64x128xf32, #tpu.memory_space<vmem>>, vector<8x128xf32>
    tpu.vector_store %arg6[%212, %c0_47], %211 {strides = array<i32>} : memref<64x128xf32, #tpu.memory_space<vmem>>, vector<8x128xf32>,
    %c6_i32 = arith.constant 6 : i32
    %c8_i32_48 = arith.constant 8 : i32
    %214 = arith.muli %c6_i32, %c8_i32_48 : i32
    %215 = tpu.assume_multiple %214, 8 : i32
    %216 = arith.index_cast %215 : i32 to index
    %c0_49 = arith.constant 0 : index
    %217 = vector.load %arg8[%216, %c0_49] : memref<64x384xf32, #tpu.memory_space<vmem>>, vector<8x384xf32>
    %218 = arith.truncf %211 : vector<8x128xf32> to vector<8x128xbf16>
    %cst_50 = arith.constant dense<0.000000e+00> : vector<8x384xf32>
    %219 = tpu.matmul %218, %7, %cst_50 {dimension_numbers = #tpu.dot_dimension_numbers<[1], [0], [0], [1], [0, 0, 1, 1], [], []>} : vector<8x128xbf16>, vector<128x384xbf16>, vector<8x384xf32> -> vector<8x384xf32>
    %220 = vector.extract_strided_slice %217 {offsets = [0, 0], sizes = [8, 128], strides = [1, 1]} : vector<8x384xf32> to vector<8x128xf32>
    %221 = vector.extract_strided_slice %217 {offsets = [0, 128], sizes = [8, 128], strides = [1, 1]} : vector<8x384xf32> to vector<8x128xf32>
    %222 = vector.extract_strided_slice %217 {offsets = [0, 256], sizes = [8, 128], strides = [1, 1]} : vector<8x384xf32> to vector<8x128xf32>
    %223 = vector.extract_strided_slice %219 {offsets = [0, 0], sizes = [8, 128], strides = [1, 1]} : vector<8x384xf32> to vector<8x128xf32>
    %224 = vector.extract_strided_slice %219 {offsets = [0, 128], sizes = [8, 128], strides = [1, 1]} : vector<8x384xf32> to vector<8x128xf32>
    %225 = vector.extract_strided_slice %219 {offsets = [0, 256], sizes = [8, 128], strides = [1, 1]} : vector<8x384xf32> to vector<8x128xf32>
    %226 = vector.broadcast %8 : vector<1x128xf32> to vector<8x128xf32>
    %227 = arith.addf %225, %226 : vector<8x128xf32>
    %228 = arith.addf %220, %223 : vector<8x128xf32>
    %229 = arith.negf %228 : vector<8x128xf32>
    %230 = math.exp %229 : vector<8x128xf32>
    %cst_51 = arith.constant 1.000000e+00 : f32
    %231 = vector.broadcast %cst_51 : f32 to vector<8x128xf32>
    %232 = arith.addf %231, %230 : vector<8x128xf32>
    %233 = arith.divf %231, %232 : vector<8x128xf32>
    %234 = arith.addf %221, %224 : vector<8x128xf32>
    %235 = arith.negf %234 : vector<8x128xf32>
    %236 = math.exp %235 : vector<8x128xf32>
    %cst_52 = arith.constant 1.000000e+00 : f32
    %237 = vector.broadcast %cst_52 : f32 to vector<8x128xf32>
    %238 = arith.addf %237, %236 : vector<8x128xf32>
    %239 = arith.divf %237, %238 : vector<8x128xf32>
    %240 = arith.mulf %233, %227 : vector<8x128xf32>
    %241 = arith.addf %222, %240 : vector<8x128xf32>
    %242 = math.tanh %241 : vector<8x128xf32>
    %243 = arith.subf %211, %242 : vector<8x128xf32>
    %244 = arith.mulf %239, %243 : vector<8x128xf32>
    %245 = arith.addf %242, %244 : vector<8x128xf32>
    %246 = arith.index_cast %215 : i32 to index
    %c0_53 = arith.constant 0 : index
    %247 = vector.load %arg6[%246, %c0_53] : memref<64x128xf32, #tpu.memory_space<vmem>>, vector<8x128xf32>
    tpu.vector_store %arg6[%246, %c0_53], %245 {strides = array<i32>} : memref<64x128xf32, #tpu.memory_space<vmem>>, vector<8x128xf32>,
    %c7_i32 = arith.constant 7 : i32
    %c8_i32_54 = arith.constant 8 : i32
    %248 = arith.muli %c7_i32, %c8_i32_54 : i32
    %249 = tpu.assume_multiple %248, 8 : i32
    %250 = arith.index_cast %249 : i32 to index
    %c0_55 = arith.constant 0 : index
    %251 = vector.load %arg8[%250, %c0_55] : memref<64x384xf32, #tpu.memory_space<vmem>>, vector<8x384xf32>
    %252 = arith.truncf %245 : vector<8x128xf32> to vector<8x128xbf16>
    %cst_56 = arith.constant dense<0.000000e+00> : vector<8x384xf32>
    %253 = tpu.matmul %252, %7, %cst_56 {dimension_numbers = #tpu.dot_dimension_numbers<[1], [0], [0], [1], [0, 0, 1, 1], [], []>} : vector<8x128xbf16>, vector<128x384xbf16>, vector<8x384xf32> -> vector<8x384xf32>
    %254 = vector.extract_strided_slice %251 {offsets = [0, 0], sizes = [8, 128], strides = [1, 1]} : vector<8x384xf32> to vector<8x128xf32>
    %255 = vector.extract_strided_slice %251 {offsets = [0, 128], sizes = [8, 128], strides = [1, 1]} : vector<8x384xf32> to vector<8x128xf32>
    %256 = vector.extract_strided_slice %251 {offsets = [0, 256], sizes = [8, 128], strides = [1, 1]} : vector<8x384xf32> to vector<8x128xf32>
    %257 = vector.extract_strided_slice %253 {offsets = [0, 0], sizes = [8, 128], strides = [1, 1]} : vector<8x384xf32> to vector<8x128xf32>
    %258 = vector.extract_strided_slice %253 {offsets = [0, 128], sizes = [8, 128], strides = [1, 1]} : vector<8x384xf32> to vector<8x128xf32>
    %259 = vector.extract_strided_slice %253 {offsets = [0, 256], sizes = [8, 128], strides = [1, 1]} : vector<8x384xf32> to vector<8x128xf32>
    %260 = vector.broadcast %8 : vector<1x128xf32> to vector<8x128xf32>
    %261 = arith.addf %259, %260 : vector<8x128xf32>
    %262 = arith.addf %254, %257 : vector<8x128xf32>
    %263 = arith.negf %262 : vector<8x128xf32>
    %264 = math.exp %263 : vector<8x128xf32>
    %cst_57 = arith.constant 1.000000e+00 : f32
    %265 = vector.broadcast %cst_57 : f32 to vector<8x128xf32>
    %266 = arith.addf %265, %264 : vector<8x128xf32>
    %267 = arith.divf %265, %266 : vector<8x128xf32>
    %268 = arith.addf %255, %258 : vector<8x128xf32>
    %269 = arith.negf %268 : vector<8x128xf32>
    %270 = math.exp %269 : vector<8x128xf32>
    %cst_58 = arith.constant 1.000000e+00 : f32
    %271 = vector.broadcast %cst_58 : f32 to vector<8x128xf32>
    %272 = arith.addf %271, %270 : vector<8x128xf32>
    %273 = arith.divf %271, %272 : vector<8x128xf32>
    %274 = arith.mulf %267, %261 : vector<8x128xf32>
    %275 = arith.addf %256, %274 : vector<8x128xf32>
    %276 = math.tanh %275 : vector<8x128xf32>
    %277 = arith.subf %245, %276 : vector<8x128xf32>
    %278 = arith.mulf %273, %277 : vector<8x128xf32>
    %279 = arith.addf %276, %278 : vector<8x128xf32>
    %280 = arith.index_cast %249 : i32 to index
    %c0_59 = arith.constant 0 : index
    %281 = vector.load %arg6[%280, %c0_59] : memref<64x128xf32, #tpu.memory_space<vmem>>, vector<8x128xf32>
    tpu.vector_store %arg6[%280, %c0_59], %279 {strides = array<i32>} : memref<64x128xf32, #tpu.memory_space<vmem>>, vector<8x128xf32>,
    %c8_i32_60 = arith.constant 8 : i32
    %c0_61 = arith.constant 0 : index
    %c0_62 = arith.constant 0 : index
    %282 = vector.load %arg7[%c0_61, %c0_62] : memref<8x128xf32, #tpu.memory_space<vmem>>, vector<8x128xf32>
    tpu.vector_store %arg7[%c0_61, %c0_62], %279 {strides = array<i32>} : memref<8x128xf32, #tpu.memory_space<vmem>>, vector<8x128xf32>,
    return
  }
}

</mosaic_0001>

<llo_original>
// kernel: tpu_custom_call.1
$region0: #{tpu_custom_call.1}
  #allocation0 [shape = 'u32[]', space=smem, size = 0x4, offset = 0x4, fixed_abs, tag = 'smem constant byte address 0x4 - core index']
  #allocation1 [shape = 'u32[144,128]{1,0:T(1,128)}', space=vmem, size = 0x12000, scoped, tag = 'internal scratch']
  #allocation2 [shape = 'f32[64,384]{1,0:T(8,128)}', space=vmem, size = 0x18000, scoped, tag = 'scratch operand']
  %s0 = inlined_call_operand.hbm [shape: bf16[64,128], index: 0, kind: input, shape index: {}]
  %s1 = inlined_call_operand.hbm [shape: bf16[128,384], index: 1, kind: input, shape index: {}]
  %s2 = inlined_call_operand.hbm [shape: bf16[128,384], index: 2, kind: input, shape index: {}]
  %s3 = inlined_call_operand.hbm [shape: f32[1,384], index: 3, kind: input, shape index: {}]
  %s4 = inlined_call_operand.hbm [shape: f32[1,128], index: 4, kind: input, shape index: {}]
  %s5 = inlined_call_operand.hbm [shape: f32[8,128], index: 5, kind: input, shape index: {}]
  %s6 = inlined_call_operand.hbm [shape: f32[64,128], index: 6, kind: output, shape index: {0}]
  %s7 = inlined_call_operand.hbm [shape: f32[8,128], index: 7, kind: output, shape index: {1}]
  %8 = xla_tuple %s6, %s7
  %s9 = sld [smem:[#allocation0]]
  $region66: #{tpu_custom_call.1} parent=0
    _
  %s11 = ssub.s32 1, %s9
  %s12 = scalar_select 0, %s11, %s9
  $region1: #{tpu_custom_call.1} parent=0
    #allocation3 [shape = 'u8[16384]{0}', space=vmem, size = 0x4000, scoped, tag = 'input window, operand 0, single buffered']
    #allocation4 [shape = 's32[1]{0}', space=sflag, size = 0x4, scoped, tag = 'scoped memory for tpu_custom_call.1']
    #allocation5 [shape = 's32[1]{0}', space=sflag, size = 0x4, scoped, tag = 'scoped memory for tpu_custom_call.1']
    #allocation6 [shape = 'u8[98304]{0}', space=vmem, size = 0x18000, scoped, tag = 'input window, operand 1, single buffered']
    #allocation7 [shape = 's32[1]{0}', space=sflag, size = 0x4, scoped, tag = 'scoped memory for tpu_custom_call.1']
    #allocation8 [shape = 'u8[98304]{0}', space=vmem, size = 0x18000, scoped, tag = 'input window, operand 2, single buffered']
    #allocation9 [shape = 'u8[1536]{0}', space=vmem, size = 0x800, scoped, tag = 'input window, operand 3, single buffered']
    #allocation10 [shape = 's32[1]{0}', space=sflag, size = 0x4, scoped, tag = 'scoped memory for tpu_custom_call.1']
    #allocation11 [shape = 'u8[512]{0}', space=vmem, size = 0x400, scoped, tag = 'input window, operand 4, single buffered']
    #allocation12 [shape = 'u8[4096]{0}', space=vmem, size = 0x1000, scoped, tag = 'input window, operand 5, single buffered']
    #allocation13 [shape = 's32[1]{0}', space=sflag, size = 0x4, scoped, tag = 'scoped memory for tpu_custom_call.1']
    #allocation14 [shape = 'u8[32768]{0}', space=vmem, size = 0x8000, scoped, tag = 'output window, operand 0, single buffered']
    #allocation15 [shape = 'u8[4096]{0}', space=vmem, size = 0x1000, scoped, tag = 'output window, operand 1, single buffered']
    #allocation16 [shape = 's32[1]{0}', space=sflag, size = 0x4, scoped, tag = 'scoped memory for tpu_custom_call.1']
    %13 = vsyncpa [#allocation4], 0
    %14 = vsyncpa [#allocation7], 0
    %15 = vsyncpa [#allocation10], 0
    %16 = vsyncpa [#allocation13], 0
    %17 = vsyncpa [#allocation5], 0
    %18 = vsyncpa [#allocation16], 0
    // Predicated region
    $region2: #{tpu_custom_call.1} parent=1 // pred_check
      _
    $region3: #{tpu_custom_call.1} parent=1 // pred_check_branch
      %20 = sbr.rel (0) target = $region5
    $region4: #{tpu_custom_call.1} parent=1 // pred_region
      %s22 = ssub.s32 512, 512
      %23 = vsyncadd [#allocation4], %s22
      %s24 = sshll.u32 [#allocation3], 4
      %s25 = int_to_ptr.vmem [resolvable:$true] %s24
      %30 = dma.hbm_to_vmem [thread:$0]  %s0, 512, %s25, [#allocation4], 64, 64, 4
    $region5: #{tpu_custom_call.1} parent=1 // pred_fallthru
      _
    // Predicated region
    $region6: #{tpu_custom_call.1} parent=1 // pred_check
      _
    $region7: #{tpu_custom_call.1} parent=1 // pred_check_branch
      %32 = sbr.rel (0) target = $region9
    $region8: #{tpu_custom_call.1} parent=1 // pred_region
      %s34 = ssub.s32 3072, 3072
      %35 = vsyncadd [#allocation7], %s34
      %s36 = sshll.u32 [#allocation6], 4
      %s37 = int_to_ptr.vmem [resolvable:$true] %s36
      %42 = dma.hbm_to_vmem [thread:$0]  %s1, 3072, %s37, [#allocation7], 192, 192, 12
    $region9: #{tpu_custom_call.1} parent=1 // pred_fallthru
      _
    // Predicated region
    $region10: #{tpu_custom_call.1} parent=1 // pred_check
      _
    $region11: #{tpu_custom_call.1} parent=1 // pred_check_branch
      %44 = sbr.rel (0) target = $region13
    $region12: #{tpu_custom_call.1} parent=1 // pred_region
      %s46 = ssub.s32 3072, 3072
      %47 = vsyncadd [#allocation7], %s46
      %s48 = sshll.u32 [#allocation8], 4
      %s49 = int_to_ptr.vmem [resolvable:$true] %s48
      %54 = dma.hbm_to_vmem [thread:$0]  %s2, 3072, %s49, [#allocation7], 192, 192, 12
    $region13: #{tpu_custom_call.1} parent=1 // pred_fallthru
      _
    // Predicated region
    $region14: #{tpu_custom_call.1} parent=1 // pred_check
      _
    $region15: #{tpu_custom_call.1} parent=1 // pred_check_branch
      %56 = sbr.rel (0) target = $region17
    $region16: #{tpu_custom_call.1} parent=1 // pred_region
      %s58 = ssub.s32 48, 48
      %59 = vsyncadd [#allocation10], %s58
      %s61 = sshll.u32 [#allocation9], 4
      %s62 = int_to_ptr.vmem [resolvable:$true] %s61
      %64 = dma.hbm_to_vmem [thread:$0]  %s3, 48, %s62, [#allocation10]
    $region17: #{tpu_custom_call.1} parent=1 // pred_fallthru
      _
    // Predicated region
    $region18: #{tpu_custom_call.1} parent=1 // pred_check
      _
    $region19: #{tpu_custom_call.1} parent=1 // pred_check_branch
      %66 = sbr.rel (0) target = $region21
    $region20: #{tpu_custom_call.1} parent=1 // pred_region
      %s68 = ssub.s32 16, 16
      %69 = vsyncadd [#allocation10], %s68
      %s71 = sshll.u32 [#allocation11], 4
      %s72 = int_to_ptr.vmem [resolvable:$true] %s71
      %74 = dma.hbm_to_vmem [thread:$0]  %s4, 16, %s72, [#allocation10]
    $region21: #{tpu_custom_call.1} parent=1 // pred_fallthru
      _
    // Predicated region
    $region22: #{tpu_custom_call.1} parent=1 // pred_check
      _
    $region23: #{tpu_custom_call.1} parent=1 // pred_check_branch
      %76 = sbr.rel (0) target = $region25
    $region24: #{tpu_custom_call.1} parent=1 // pred_region
      %s78 = ssub.s32 128, 128
      %79 = vsyncadd [#allocation13], %s78
      %s81 = sshll.u32 [#allocation12], 4
      %s82 = int_to_ptr.vmem [resolvable:$true] %s81
      %84 = dma.hbm_to_vmem [thread:$0]  %s5, 128, %s82, [#allocation13]
    $region25: #{tpu_custom_call.1} parent=1 // pred_fallthru
      _
    // Predicated region
    $region26: #{tpu_custom_call.1} parent=1 // pred_check
      _
    $region27: #{tpu_custom_call.1} parent=1 // pred_check_branch
      %86 = sbr.rel (0) target = $region29
    $region28: #{tpu_custom_call.1} parent=1 // pred_region
      %87 = dma.done [#allocation4], 512
    $region29: #{tpu_custom_call.1} parent=1 // pred_fallthru
      _
    // Predicated region
    $region30: #{tpu_custom_call.1} parent=1 // pred_check
      _
    $region31: #{tpu_custom_call.1} parent=1 // pred_check_branch
      %89 = sbr.rel (0) target = $region33
    $region32: #{tpu_custom_call.1} parent=1 // pred_region
      %90 = dma.done [#allocation7], 3072
    $region33: #{tpu_custom_call.1} parent=1 // pred_fallthru
      _
    // Predicated region
    $region34: #{tpu_custom_call.1} parent=1 // pred_check
      _
    $region35: #{tpu_custom_call.1} parent=1 // pred_check_branch
      %92 = sbr.rel (0) target = $region37
    $region36: #{tpu_custom_call.1} parent=1 // pred_region
      %93 = dma.done [#allocation7], 3072
    $region37: #{tpu_custom_call.1} parent=1 // pred_fallthru
      _
    // Predicated region
    $region38: #{tpu_custom_call.1} parent=1 // pred_check
      _
    $region39: #{tpu_custom_call.1} parent=1 // pred_check_branch
      %95 = sbr.rel (0) target = $region41
    $region40: #{tpu_custom_call.1} parent=1 // pred_region
      %96 = dma.done [#allocation10], 48
    $region41: #{tpu_custom_call.1} parent=1 // pred_fallthru
      _
    // Predicated region
    $region42: #{tpu_custom_call.1} parent=1 // pred_check
      _
    $region43: #{tpu_custom_call.1} parent=1 // pred_check_branch
      %98 = sbr.rel (0) target = $region45
    $region44: #{tpu_custom_call.1} parent=1 // pred_region
      %99 = dma.done [#allocation10], 16
    $region45: #{tpu_custom_call.1} parent=1 // pred_fallthru
      _
    // Predicated region
    $region46: #{tpu_custom_call.1} parent=1 // pred_check
      _
    $region47: #{tpu_custom_call.1} parent=1 // pred_check_branch
      %101 = sbr.rel (0) target = $region49
    $region48: #{tpu_custom_call.1} parent=1 // pred_region
      %102 = dma.done [#allocation13], 128
    $region49: #{tpu_custom_call.1} parent=1 // pred_fallthru
      _
    %v104 = vld [vmem:[#allocation3] sm:$0xf]
    %v105 = vld [vmem:[#allocation3 + $0x4] sm:$0xf]
    %v106 = vld [vmem:[#allocation3 + $0x8] sm:$0xf]
    %v107 = vld [vmem:[#allocation3 + $0xc] sm:$0xf]
    %v108 = vld [vmem:[#allocation3 + $0x10] sm:$0xf]
    %v109 = vld [vmem:[#allocation3 + $0x14] sm:$0xf]
    %v110 = vld [vmem:[#allocation3 + $0x18] sm:$0xf]
    %v111 = vld [vmem:[#allocation3 + $0x1c] sm:$0xf]
    %v112 = vld [vmem:[#allocation6] sm:$0xff]
    %v113 = vld [vmem:[#allocation6 + $0x8] sm:$0xf]
    %v114 = vld [vmem:[#allocation6 + $0xc] sm:$0xff]
    %v115 = vld [vmem:[#allocation6 + $0x14] sm:$0xf]
    %v116 = vld [vmem:[#allocation6 + $0x18] sm:$0xff]
    %v117 = vld [vmem:[#allocation6 + $0x20] sm:$0xf]
    %v118 = vld [vmem:[#allocation6 + $0x24] sm:$0xff]
    %v119 = vld [vmem:[#allocation6 + $0x2c] sm:$0xf]
    %v120 = vld [vmem:[#allocation6 + $0x30] sm:$0xff]
    %v121 = vld [vmem:[#allocation6 + $0x38] sm:$0xf]
    %v122 = vld [vmem:[#allocation6 + $0x3c] sm:$0xff]
    %v123 = vld [vmem:[#allocation6 + $0x44] sm:$0xf]
    %v124 = vld [vmem:[#allocation6 + $0x48] sm:$0xff]
    %v125 = vld [vmem:[#allocation6 + $0x50] sm:$0xf]
    %v126 = vld [vmem:[#allocation6 + $0x54] sm:$0xff]
    %v127 = vld [vmem:[#allocation6 + $0x5c] sm:$0xf]
    %v128 = vld [vmem:[#allocation6 + $0x60] sm:$0xff]
    %v129 = vld [vmem:[#allocation6 + $0x68] sm:$0xf]
    %v130 = vld [vmem:[#allocation6 + $0x6c] sm:$0xff]
    %v131 = vld [vmem:[#allocation6 + $0x74] sm:$0xf]
    %v132 = vld [vmem:[#allocation6 + $0x78] sm:$0xff]
    %v133 = vld [vmem:[#allocation6 + $0x80] sm:$0xf]
    %v134 = vld [vmem:[#allocation6 + $0x84] sm:$0xff]
    %v135 = vld [vmem:[#allocation6 + $0x8c] sm:$0xf]
    %v136 = vld [vmem:[#allocation6 + $0x90] sm:$0xff]
    %v137 = vld [vmem:[#allocation6 + $0x98] sm:$0xf]
    %v138 = vld [vmem:[#allocation6 + $0x9c] sm:$0xff]
    %v139 = vld [vmem:[#allocation6 + $0xa4] sm:$0xf]
    %v140 = vld [vmem:[#allocation6 + $0xa8] sm:$0xff]
    %v141 = vld [vmem:[#allocation6 + $0xb0] sm:$0xf]
    %v142 = vld [vmem:[#allocation6 + $0xb4] sm:$0xff]
    %v143 = vld [vmem:[#allocation6 + $0xbc] sm:$0xf]
    %v144 = vld [vmem:[#allocation9] sm:$0x7]
    %v146 = vlaneseq
    %v147 = vshrl.u32 %v146, 7
    %v148 = vsub.s32 0, %v147
    %v149 = vrot.slane %v144, %v148
    %v150 = vlaneseq
    %v151 = vshrl.u32 %v150, 7
    %v152 = vsub.s32 1, %v151
    %v153 = vrot.slane %v144, %v152
    %v154 = vlaneseq
    %v155 = vshrl.u32 %v154, 7
    %v156 = vsub.s32 2, %v155
    %v157 = vrot.slane %v144, %v156
    %v169 = vunpack.c.l.b16 %v104
    %v170 = vunpack.c.l.b16 %v105
    %v171 = vunpack.c.l.b16 %v106
    %v172 = vunpack.c.l.b16 %v107
    %v173 = vunpack.c.l.b16 %v108
    %v174 = vunpack.c.l.b16 %v109
    %v175 = vunpack.c.l.b16 %v110
    %v176 = vunpack.c.l.b16 %v111
    %v177 = vpack.c.b16 %v170, %v169
    %v178 = vpack.c.b16 %v172, %v171
    %v179 = vpack.c.b16 %v174, %v173
    %v180 = vpack.c.b16 %v176, %v175
    %v217 = vunpack.c.l.b16 %v112
    %v218 = vunpack.c.h.b16 %v112
    %v219 = vunpack.c.l.b16 %v113
    %v220 = vunpack.c.l.b16 %v114
    %v221 = vunpack.c.h.b16 %v114
    %v222 = vunpack.c.l.b16 %v115
    %v223 = vunpack.c.l.b16 %v116
    %v224 = vunpack.c.h.b16 %v116
    %v225 = vunpack.c.l.b16 %v117
    %v226 = vunpack.c.l.b16 %v118
    %v227 = vunpack.c.h.b16 %v118
    %v228 = vunpack.c.l.b16 %v119
    %v229 = vunpack.c.l.b16 %v120
    %v230 = vunpack.c.h.b16 %v120
    %v231 = vunpack.c.l.b16 %v121
    %v232 = vunpack.c.l.b16 %v122
    %v233 = vunpack.c.h.b16 %v122
    %v234 = vunpack.c.l.b16 %v123
    %v235 = vunpack.c.l.b16 %v124
    %v236 = vunpack.c.h.b16 %v124
    %v237 = vunpack.c.l.b16 %v125
    %v238 = vunpack.c.l.b16 %v126
    %v239 = vunpack.c.h.b16 %v126
    %v240 = vunpack.c.l.b16 %v127
    %v241 = vunpack.c.l.b16 %v128
    %v242 = vunpack.c.h.b16 %v128
    %v243 = vunpack.c.l.b16 %v129
    %v244 = vunpack.c.l.b16 %v130
    %v245 = vunpack.c.h.b16 %v130
    %v246 = vunpack.c.l.b16 %v131
    %v247 = vunpack.c.l.b16 %v132
    %v248 = vunpack.c.h.b16 %v132
    %v249 = vunpack.c.l.b16 %v133
    %v250 = vunpack.c.l.b16 %v134
    %v251 = vunpack.c.h.b16 %v134
    %v252 = vunpack.c.l.b16 %v135
    %v253 = vunpack.c.l.b16 %v136
    %v254 = vunpack.c.h.b16 %v136
    %v255 = vunpack.c.l.b16 %v137
    %v256 = vunpack.c.l.b16 %v138
    %v257 = vunpack.c.h.b16 %v138
    %v258 = vunpack.c.l.b16 %v139
    %v259 = vunpack.c.l.b16 %v140
    %v260 = vunpack.c.h.b16 %v140
    %v261 = vunpack.c.l.b16 %v141
    %v262 = vunpack.c.l.b16 %v142
    %v263 = vunpack.c.h.b16 %v142
    %v264 = vunpack.c.l.b16 %v143
    %v265 = vpack.c.b16 %v220, %v217
    %v266 = vpack.c.b16 %v221, %v218
    %v267 = vpack.c.b16 %v222, %v219
    %v268 = vpack.c.b16 %v226, %v223
    %v269 = vpack.c.b16 %v227, %v224
    %v270 = vpack.c.b16 %v228, %v225
    %v271 = vpack.c.b16 %v232, %v229
    %v272 = vpack.c.b16 %v233, %v230
    %v273 = vpack.c.b16 %v234, %v231
    %v274 = vpack.c.b16 %v238, %v235
    %v275 = vpack.c.b16 %v239, %v236
    %v276 = vpack.c.b16 %v240, %v237
    %v277 = vpack.c.b16 %v244, %v241
    %v278 = vpack.c.b16 %v245, %v242
    %v279 = vpack.c.b16 %v246, %v243
    %v280 = vpack.c.b16 %v250, %v247
    %v281 = vpack.c.b16 %v251, %v248
    %v282 = vpack.c.b16 %v252, %v249
    %v283 = vpack.c.b16 %v256, %v253
    %v284 = vpack.c.b16 %v257, %v254
    %v285 = vpack.c.b16 %v258, %v255
    %v286 = vpack.c.b16 %v262, %v259
    %v287 = vpack.c.b16 %v263, %v260
    %v288 = vpack.c.b16 %v264, %v261
    %313 = vmatprep.subr.bf16.mxu0 %v266
    %314 = vmatpush1.bf16.msra.mxu0 %v265
    %315 = vmatprep.subr.bf16.mxu0 %v269
    %316 = vmatpush1.bf16.msra.mxu0 %v268
    %317 = vmatprep.subr.bf16.mxu0 %v272
    %318 = vmatpush1.bf16.msra.mxu0 %v271
    %319 = vmatprep.subr.bf16.mxu0 %v275
    %320 = vmatpush1.bf16.msra.mxu0 %v274
    %321 = vmatprep.subr.bf16.mxu0 %v278
    %322 = vmatpush1.bf16.msra.mxu0 %v277
    %323 = vmatprep.subr.bf16.mxu0 %v281
    %324 = vmatpush1.bf16.msra.mxu0 %v280
    %325 = vmatprep.subr.bf16.mxu0 %v284
    %326 = vmatpush1.bf16.msra.mxu0 %v283
    %327 = vmatprep.subr.bf16.mxu0 %v287
    %328 = vmatpush1.bf16.msra.mxu0 %v286
    %329 = vmatprep.subr.bf16.mxu0 0
    %330 = vmatpush1.bf16.msra.mxu0 0
    %331 = vmatprep.subr.bf16.mxu0 0
    %332 = vmatpush1.bf16.msra.mxu0 0
    %333 = vmatprep.subr.bf16.mxu0 0
    %334 = vmatpush1.bf16.msra.mxu0 0
    %335 = vmatprep.subr.bf16.mxu0 0
    %336 = vmatpush1.bf16.msra.mxu0 0
    %337 = vmatprep.subr.bf16.mxu0 0
    %338 = vmatpush1.bf16.msra.mxu0 0
    %339 = vmatprep.subr.bf16.mxu0 0
    %340 = vmatpush1.bf16.msra.mxu0 0
    %341 = vmatprep.subr.bf16.mxu0 0
    %342 = vmatpush1.bf16.msra.mxu0 0
    %343 = vmatprep.subr.bf16.mxu0 0
    %344 = vmatpush1.bf16.msra.mxu0 0
    %345 = vmatprep.mubr.bf16.mxu0 0
    %346 = vmatmul.mubr.bf16.gmra.mrb[0].mxu0 %v177
    %v347 = vpop.f32.mrb[0].mxu0
    %v348 = vadd.f32 %v149, %v347
    %v349 = vpop.f32.mrb[0].mxu0
    %v350 = vadd.f32 %v153, %v349
    %v351 = vpop.f32.mrb[0].mxu0
    %v352 = vadd.f32 %v149, %v351
    %v353 = vpop.f32.mrb[0].mxu0
    %v354 = vadd.f32 %v153, %v353
    %355 = vmatprep.mubr.bf16.mxu0 0
    %356 = vmatmul.mubr.bf16.gmra.mrb[0].mxu0 %v178
    %v357 = vpop.f32.mrb[0].mxu0
    %v358 = vadd.f32 %v149, %v357
    %v359 = vpop.f32.mrb[0].mxu0
    %v360 = vadd.f32 %v153, %v359
    %v361 = vpop.f32.mrb[0].mxu0
    %v362 = vadd.f32 %v149, %v361
    %v363 = vpop.f32.mrb[0].mxu0
    %v364 = vadd.f32 %v153, %v363
    %365 = vmatprep.mubr.bf16.mxu0 0
    %366 = vmatmul.mubr.bf16.gmra.mrb[0].mxu0 %v179
    %v367 = vpop.f32.mrb[0].mxu0
    %v368 = vadd.f32 %v149, %v367
    %v369 = vpop.f32.mrb[0].mxu0
    %v370 = vadd.f32 %v153, %v369
    %v371 = vpop.f32.mrb[0].mxu0
    %v372 = vadd.f32 %v149, %v371
    %v373 = vpop.f32.mrb[0].mxu0
    %v374 = vadd.f32 %v153, %v373
    %375 = vmatprep.mubr.bf16.mxu0 0
    %376 = vmatmul.mubr.bf16.gmra.mrb[0].mxu0 %v180
    %v377 = vpop.f32.mrb[0].mxu0
    %v378 = vadd.f32 %v149, %v377
    %v379 = vpop.f32.mrb[0].mxu0
    %v380 = vadd.f32 %v153, %v379
    %v381 = vpop.f32.mrb[0].mxu0
    %v382 = vadd.f32 %v149, %v381
    %v383 = vpop.f32.mrb[0].mxu0
    %v384 = vadd.f32 %v153, %v383
    %385 = vdwg.mxu0
    %386 = vmatprep.subr.bf16.mxu0 0
    %387 = vmatpush1.bf16.msra.mxu0 %v267
    %388 = vmatprep.subr.bf16.mxu0 0
    %389 = vmatpush1.bf16.msra.mxu0 %v270
    %390 = vmatprep.subr.bf16.mxu0 0
    %391 = vmatpush1.bf16.msra.mxu0 %v273
    %392 = vmatprep.subr.bf16.mxu0 0
    %393 = vmatpush1.bf16.msra.mxu0 %v276
    %394 = vmatprep.subr.bf16.mxu0 0
    %395 = vmatpush1.bf16.msra.mxu0 %v279
    %396 = vmatprep.subr.bf16.mxu0 0
    %397 = vmatpush1.bf16.msra.mxu0 %v282
    %398 = vmatprep.subr.bf16.mxu0 0
    %399 = vmatpush1.bf16.msra.mxu0 %v285
    %400 = vmatprep.subr.bf16.mxu0 0
    %401 = vmatpush1.bf16.msra.mxu0 %v288
    %402 = vmatprep.subr.bf16.mxu0 0
    %403 = vmatpush1.bf16.msra.mxu0 0
    %404 = vmatprep.subr.bf16.mxu0 0
    %405 = vmatpush1.bf16.msra.mxu0 0
    %406 = vmatprep.subr.bf16.mxu0 0
    %407 = vmatpush1.bf16.msra.mxu0 0
    %408 = vmatprep.subr.bf16.mxu0 0
    %409 = vmatpush1.bf16.msra.mxu0 0
    %410 = vmatprep.subr.bf16.mxu0 0
    %411 = vmatpush1.bf16.msra.mxu0 0
    %412 = vmatprep.subr.bf16.mxu0 0
    %413 = vmatpush1.bf16.msra.mxu0 0
    %414 = vmatprep.subr.bf16.mxu0 0
    %415 = vmatpush1.bf16.msra.mxu0 0
    %416 = vmatprep.subr.bf16.mxu0 0
    %417 = vmatpush1.bf16.msra.mxu0 0
    %418 = vmatprep.mubr.bf16.mxu0 0
    %419 = vmatmul.mubr.bf16.gmra.mrb[0].mxu0 %v177
    %v420 = vpop.f32.mrb[0].mxu0
    %v421 = vadd.f32 %v157, %v420
    %v422 = vpop.f32.mrb[0].mxu0
    %v423 = vpop.f32.mrb[0].mxu0
    %v424 = vadd.f32 %v157, %v423
    %v425 = vpop.f32.mrb[0].mxu0
    %426 = vmatprep.mubr.bf16.mxu0 0
    %427 = vmatmul.mubr.bf16.gmra.mrb[0].mxu0 %v178
    %v428 = vpop.f32.mrb[0].mxu0
    %v429 = vadd.f32 %v157, %v428
    %v430 = vpop.f32.mrb[0].mxu0
    %v431 = vpop.f32.mrb[0].mxu0
    %v432 = vadd.f32 %v157, %v431
    %v433 = vpop.f32.mrb[0].mxu0
    %434 = vmatprep.mubr.bf16.mxu0 0
    %435 = vmatmul.mubr.bf16.gmra.mrb[0].mxu0 %v179
    %v436 = vpop.f32.mrb[0].mxu0
    %v437 = vadd.f32 %v157, %v436
    %v438 = vpop.f32.mrb[0].mxu0
    %v439 = vpop.f32.mrb[0].mxu0
    %v440 = vadd.f32 %v157, %v439
    %v441 = vpop.f32.mrb[0].mxu0
    %442 = vmatprep.mubr.bf16.mxu0 0
    %443 = vmatmul.mubr.bf16.gmra.mrb[0].mxu0 %v180
    %v444 = vpop.f32.mrb[0].mxu0
    %v445 = vadd.f32 %v157, %v444
    %v446 = vpop.f32.mrb[0].mxu0
    %v447 = vpop.f32.mrb[0].mxu0
    %v448 = vadd.f32 %v157, %v447
    %v449 = vpop.f32.mrb[0].mxu0
    %450 = vdwg.mxu0
    %451 = vst [vmem:[#allocation2] sm:$0xff] %v348
    %452 = vst [vmem:[#allocation2 + $0x8] sm:$0xff] %v350
    %453 = vst [vmem:[#allocation2 + $0x10] sm:$0xff] %v421
    %454 = vst [vmem:[#allocation2 + $0x18] sm:$0xff] %v352
    %455 = vst [vmem:[#allocation2 + $0x20] sm:$0xff] %v354
    %456 = vst [vmem:[#allocation2 + $0x28] sm:$0xff] %v424
    %457 = vst [vmem:[#allocation2 + $0x30] sm:$0xff] %v358
    %458 = vst [vmem:[#allocation2 + $0x38] sm:$0xff] %v360
    %459 = vst [vmem:[#allocation2 + $0x40] sm:$0xff] %v429
    %460 = vst [vmem:[#allocation2 + $0x48] sm:$0xff] %v362
    %461 = vst [vmem:[#allocation2 + $0x50] sm:$0xff] %v364
    %462 = vst [vmem:[#allocation2 + $0x58] sm:$0xff] %v432
    %463 = vst [vmem:[#allocation2 + $0x60] sm:$0xff] %v368
    %464 = vst [vmem:[#allocation2 + $0x68] sm:$0xff] %v370
    %465 = vst [vmem:[#allocation2 + $0x70] sm:$0xff] %v437
    %466 = vst [vmem:[#allocation2 + $0x78] sm:$0xff] %v372
    %467 = vst [vmem:[#allocation2 + $0x80] sm:$0xff] %v374
    %468 = vst [vmem:[#allocation2 + $0x88] sm:$0xff] %v440
    %469 = vst [vmem:[#allocation2 + $0x90] sm:$0xff] %v378
    %470 = vst [vmem:[#allocation2 + $0x98] sm:$0xff] %v380
    %471 = vst [vmem:[#allocation2 + $0xa0] sm:$0xff] %v445
    %472 = vst [vmem:[#allocation2 + $0xa8] sm:$0xff] %v382
    %473 = vst [vmem:[#allocation2 + $0xb0] sm:$0xff] %v384
    %474 = vst [vmem:[#allocation2 + $0xb8] sm:$0xff] %v448
    %v475 = vld [vmem:[#allocation8] sm:$0xff]
    %v476 = vld [vmem:[#allocation8 + $0x8] sm:$0xf]
    %v477 = vld [vmem:[#allocation8 + $0xc] sm:$0xff]
    %v478 = vld [vmem:[#allocation8 + $0x14] sm:$0xf]
    %v479 = vld [vmem:[#allocation8 + $0x18] sm:$0xff]
    %v480 = vld [vmem:[#allocation8 + $0x20] sm:$0xf]
    %v481 = vld [vmem:[#allocation8 + $0x24] sm:$0xff]
    %v482 = vld [vmem:[#allocation8 + $0x2c] sm:$0xf]
    %v483 = vld [vmem:[#allocation8 + $0x30] sm:$0xff]
    %v484 = vld [vmem:[#allocation8 + $0x38] sm:$0xf]
    %v485 = vld [vmem:[#allocation8 + $0x3c] sm:$0xff]
    %v486 = vld [vmem:[#allocation8 + $0x44] sm:$0xf]
    %v487 = vld [vmem:[#allocation8 + $0x48] sm:$0xff]
    %v488 = vld [vmem:[#allocation8 + $0x50] sm:$0xf]
    %v489 = vld [vmem:[#allocation8 + $0x54] sm:$0xff]
    %v490 = vld [vmem:[#allocation8 + $0x5c] sm:$0xf]
    %v491 = vld [vmem:[#allocation8 + $0x60] sm:$0xff]
    %v492 = vld [vmem:[#allocation8 + $0x68] sm:$0xf]
    %v493 = vld [vmem:[#allocation8 + $0x6c] sm:$0xff]
    %v494 = vld [vmem:[#allocation8 + $0x74] sm:$0xf]
    %v495 = vld [vmem:[#allocation8 + $0x78] sm:$0xff]
    %v496 = vld [vmem:[#allocation8 + $0x80] sm:$0xf]
    %v497 = vld [vmem:[#allocation8 + $0x84] sm:$0xff]
    %v498 = vld [vmem:[#allocation8 + $0x8c] sm:$0xf]
    %v499 = vld [vmem:[#allocation8 + $0x90] sm:$0xff]
    %v500 = vld [vmem:[#allocation8 + $0x98] sm:$0xf]
    %v501 = vld [vmem:[#allocation8 + $0x9c] sm:$0xff]
    %v502 = vld [vmem:[#allocation8 + $0xa4] sm:$0xf]
    %v503 = vld [vmem:[#allocation8 + $0xa8] sm:$0xff]
    %v504 = vld [vmem:[#allocation8 + $0xb0] sm:$0xf]
    %v505 = vld [vmem:[#allocation8 + $0xb4] sm:$0xff]
    %v506 = vld [vmem:[#allocation8 + $0xbc] sm:$0xf]
    %v507 = vld [vmem:[#allocation11] sm:$0x1]
    %v508 = vld [vmem:[#allocation12] sm:$0xff]
    %s509 = smul.u32 0, 3
    %s510 = smul.addr %s509, 8
    %s511 = scalar_lea.vmem [#allocation2], %s510
    %v512 = vld [vmem:[%s511] sm:$0xff]
    %v513 = vld [vmem:[%s511 + $0x8] sm:$0xff]
    %v514 = vld [vmem:[%s511 + $0x10] sm:$0xff]
    %v515 = vpack.c.bf16 %v508, %v508
    %v548 = vunpack.c.l.b16 %v475
    %v549 = vunpack.c.h.b16 %v475
    %v550 = vunpack.c.l.b16 %v476
    %v551 = vunpack.c.l.b16 %v477
    %v552 = vunpack.c.h.b16 %v477
    %v553 = vunpack.c.l.b16 %v478
    %v554 = vunpack.c.l.b16 %v479
    %v555 = vunpack.c.h.b16 %v479
    %v556 = vunpack.c.l.b16 %v480
    %v557 = vunpack.c.l.b16 %v481
    %v558 = vunpack.c.h.b16 %v481
    %v559 = vunpack.c.l.b16 %v482
    %v560 = vunpack.c.l.b16 %v483
    %v561 = vunpack.c.h.b16 %v483
    %v562 = vunpack.c.l.b16 %v484
    %v563 = vunpack.c.l.b16 %v485
    %v564 = vunpack.c.h.b16 %v485
    %v565 = vunpack.c.l.b16 %v486
    %v566 = vunpack.c.l.b16 %v487
    %v567 = vunpack.c.h.b16 %v487
    %v568 = vunpack.c.l.b16 %v488
    %v569 = vunpack.c.l.b16 %v489
    %v570 = vunpack.c.h.b16 %v489
    %v571 = vunpack.c.l.b16 %v490
    %v572 = vunpack.c.l.b16 %v491
    %v573 = vunpack.c.h.b16 %v491
    %v574 = vunpack.c.l.b16 %v492
    %v575 = vunpack.c.l.b16 %v493
    %v576 = vunpack.c.h.b16 %v493
    %v577 = vunpack.c.l.b16 %v494
    %v578 = vunpack.c.l.b16 %v495
    %v579 = vunpack.c.h.b16 %v495
    %v580 = vunpack.c.l.b16 %v496
    %v581 = vunpack.c.l.b16 %v497
    %v582 = vunpack.c.h.b16 %v497
    %v583 = vunpack.c.l.b16 %v498
    %v584 = vunpack.c.l.b16 %v499
    %v585 = vunpack.c.h.b16 %v499
    %v586 = vunpack.c.l.b16 %v500
    %v587 = vunpack.c.l.b16 %v501
    %v588 = vunpack.c.h.b16 %v501
    %v589 = vunpack.c.l.b16 %v502
    %v590 = vunpack.c.l.b16 %v503
    %v591 = vunpack.c.h.b16 %v503
    %v592 = vunpack.c.l.b16 %v504
    %v593 = vunpack.c.l.b16 %v505
    %v594 = vunpack.c.h.b16 %v505
    %v595 = vunpack.c.l.b16 %v506
    %v596 = vpack.c.b16 %v551, %v548
    %v597 = vpack.c.b16 %v552, %v549
    %v598 = vpack.c.b16 %v553, %v550
    %v599 = vpack.c.b16 %v557, %v554
    %v600 = vpack.c.b16 %v558, %v555
    %v601 = vpack.c.b16 %v559, %v556
    %v602 = vpack.c.b16 %v563, %v560
    %v603 = vpack.c.b16 %v564, %v561
    %v604 = vpack.c.b16 %v565, %v562
    %v605 = vpack.c.b16 %v569, %v566
    %v606 = vpack.c.b16 %v570, %v567
    %v607 = vpack.c.b16 %v571, %v568
    %v608 = vpack.c.b16 %v575, %v572
    %v609 = vpack.c.b16 %v576, %v573
    %v610 = vpack.c.b16 %v577, %v574
    %v611 = vpack.c.b16 %v581, %v578
    %v612 = vpack.c.b16 %v582, %v579
    %v613 = vpack.c.b16 %v583, %v580
    %v614 = vpack.c.b16 %v587, %v584
    %v615 = vpack.c.b16 %v588, %v585
    %v616 = vpack.c.b16 %v589, %v586
    %v617 = vpack.c.b16 %v593, %v590
    %v618 = vpack.c.b16 %v594, %v591
    %v619 = vpack.c.b16 %v595, %v592
    %644 = vmatprep.subr.bf16.mxu0 %v597
    %645 = vmatpush1.bf16.msra.mxu0 %v596
    %646 = vmatprep.subr.bf16.mxu0 %v600
    %647 = vmatpush1.bf16.msra.mxu0 %v599
    %648 = vmatprep.subr.bf16.mxu0 %v603
    %649 = vmatpush1.bf16.msra.mxu0 %v602
    %650 = vmatprep.subr.bf16.mxu0 %v606
    %651 = vmatpush1.bf16.msra.mxu0 %v605
    %652 = vmatprep.subr.bf16.mxu0 %v609
    %653 = vmatpush1.bf16.msra.mxu0 %v608
    %654 = vmatprep.subr.bf16.mxu0 %v612
    %655 = vmatpush1.bf16.msra.mxu0 %v611
    %656 = vmatprep.subr.bf16.mxu0 %v615
    %657 = vmatpush1.bf16.msra.mxu0 %v614
    %658 = vmatprep.subr.bf16.mxu0 %v618
    %659 = vmatpush1.bf16.msra.mxu0 %v617
    %660 = vmatprep.subr.bf16.mxu0 0
    %661 = vmatpush1.bf16.msra.mxu0 0
    %662 = vmatprep.subr.bf16.mxu0 0
    %663 = vmatpush1.bf16.msra.mxu0 0
    %664 = vmatprep.subr.bf16.mxu0 0
    %665 = vmatpush1.bf16.msra.mxu0 0
    %666 = vmatprep.subr.bf16.mxu0 0
    %667 = vmatpush1.bf16.msra.mxu0 0
    %668 = vmatprep.subr.bf16.mxu0 0
    %669 = vmatpush1.bf16.msra.mxu0 0
    %670 = vmatprep.subr.bf16.mxu0 0
    %671 = vmatpush1.bf16.msra.mxu0 0
    %672 = vmatprep.subr.bf16.mxu0 0
    %673 = vmatpush1.bf16.msra.mxu0 0
    %674 = vmatprep.subr.bf16.mxu0 0
    %675 = vmatpush1.bf16.msra.mxu0 0
    %676 = vmatprep.mubr.bf16.mxu0 0
    %677 = vmatmul.mubr.bf16.gmra.mrb[0].mxu0 %v515
    %v678 = vpop.f32.mrb[0].mxu0
    %v679 = vadd.f32 0.0, %v678
    %v680 = vpop.f32.mrb[0].mxu0
    %v681 = vadd.f32 0.0, %v680
    %v682 = vpop.f32.mrb[0].mxu0
    %v683 = vpop.f32.mrb[0].mxu0
    %684 = vdwg.mxu0
    %685 = vmatprep.subr.bf16.mxu0 0
    %686 = vmatpush1.bf16.msra.mxu0 %v598
    %687 = vmatprep.subr.bf16.mxu0 0
    %688 = vmatpush1.bf16.msra.mxu0 %v601
    %689 = vmatprep.subr.bf16.mxu0 0
    %690 = vmatpush1.bf16.msra.mxu0 %v604
    %691 = vmatprep.subr.bf16.mxu0 0
    %692 = vmatpush1.bf16.msra.mxu0 %v607
    %693 = vmatprep.subr.bf16.mxu0 0
    %694 = vmatpush1.bf16.msra.mxu0 %v610
    %695 = vmatprep.subr.bf16.mxu0 0
    %696 = vmatpush1.bf16.msra.mxu0 %v613
    %697 = vmatprep.subr.bf16.mxu0 0
    %698 = vmatpush1.bf16.msra.mxu0 %v616
    %699 = vmatprep.subr.bf16.mxu0 0
    %700 = vmatpush1.bf16.msra.mxu0 %v619
    %701 = vmatprep.subr.bf16.mxu0 0
    %702 = vmatpush1.bf16.msra.mxu0 0
    %703 = vmatprep.subr.bf16.mxu0 0
    %704 = vmatpush1.bf16.msra.mxu0 0
    %705 = vmatprep.subr.bf16.mxu0 0
    %706 = vmatpush1.bf16.msra.mxu0 0
    %707 = vmatprep.subr.bf16.mxu0 0
    %708 = vmatpush1.bf16.msra.mxu0 0
    %709 = vmatprep.subr.bf16.mxu0 0
    %710 = vmatpush1.bf16.msra.mxu0 0
    %711 = vmatprep.subr.bf16.mxu0 0
    %712 = vmatpush1.bf16.msra.mxu0 0
    %713 = vmatprep.subr.bf16.mxu0 0
    %714 = vmatpush1.bf16.msra.mxu0 0
    %715 = vmatprep.subr.bf16.mxu0 0
    %716 = vmatpush1.bf16.msra.mxu0 0
    %717 = vmatprep.mubr.bf16.mxu0 0
    %718 = vmatmul.mubr.bf16.gmra.mrb[0].mxu0 %v515
    %v719 = vpop.f32.mrb[0].mxu0
    %v720 = vadd.f32 0.0, %v719
    %v721 = vpop.f32.mrb[0].mxu0
    %v722 = vpop.f32.mrb[0].mxu0
    %v723 = vpop.f32.mrb[0].mxu0
    %724 = vdwg.mxu0
    %v726 = vlaneseq
    %v727 = vshrl.u32 %v726, 7
    %v728 = vsub.s32 0, %v727
    %v729 = vrot.slane %v507, %v728
    %v731 = vadd.f32 %v720, %v729
    %v732 = vadd.f32 %v512, %v679
    %v733 = vxor.u32 %v732, 2147483648
    %v734 = vmul.f32 %v733, 1.442695
    %v735 = vpow.pop %v734
    %v736 = vadd.f32 %v735, 1.0
    %v737 = vrcp.pop %v736
    %v738 = vmul.f32 1.0, %v737
    %v739 = vadd.f32 %v513, %v681
    %v740 = vxor.u32 %v739, 2147483648
    %v741 = vmul.f32 %v740, 1.442695
    %v742 = vpow.pop %v741
    %v743 = vadd.f32 %v742, 1.0
    %v744 = vrcp.pop %v743
    %v745 = vmul.f32 1.0, %v744
    %v746 = vmul.f32 %v738, %v731
    %v747 = vadd.f32 %v514, %v746
    %v748 = vtanh.pop %v747
    %v749 = vsub.f32 %v508, %v748
    %v750 = vmul.f32 %v745, %v749
    %v751 = vadd.f32 %v748, %v750
    %752 = vst [vmem:[#allocation14] sm:$0xff] %v751
    %s753 = smul.u32 1, 3
    %s754 = smul.addr %s753, 8
    %s755 = scalar_lea.vmem [#allocation2], %s754
    %v756 = vld [vmem:[%s755] sm:$0xff]
    %v757 = vld [vmem:[%s755 + $0x8] sm:$0xff]
    %v758 = vld [vmem:[%s755 + $0x10] sm:$0xff]
    %v759 = vpack.c.bf16 %v751, %v751
    %760 = vmatprep.subr.bf16.mxu0 %v597
    %761 = vmatpush1.bf16.msra.mxu0 %v596
    %762 = vmatprep.subr.bf16.mxu0 %v600
    %763 = vmatpush1.bf16.msra.mxu0 %v599
    %764 = vmatprep.subr.bf16.mxu0 %v603
    %765 = vmatpush1.bf16.msra.mxu0 %v602
    %766 = vmatprep.subr.bf16.mxu0 %v606
    %767 = vmatpush1.bf16.msra.mxu0 %v605
    %768 = vmatprep.subr.bf16.mxu0 %v609
    %769 = vmatpush1.bf16.msra.mxu0 %v608
    %770 = vmatprep.subr.bf16.mxu0 %v612
    %771 = vmatpush1.bf16.msra.mxu0 %v611
    %772 = vmatprep.subr.bf16.mxu0 %v615
    %773 = vmatpush1.bf16.msra.mxu0 %v614
    %774 = vmatprep.subr.bf16.mxu0 %v618
    %775 = vmatpush1.bf16.msra.mxu0 %v617
    %776 = vmatprep.subr.bf16.mxu0 0
    %777 = vmatpush1.bf16.msra.mxu0 0
    %778 = vmatprep.subr.bf16.mxu0 0
    %779 = vmatpush1.bf16.msra.mxu0 0
    %780 = vmatprep.subr.bf16.mxu0 0
    %781 = vmatpush1.bf16.msra.mxu0 0
    %782 = vmatprep.subr.bf16.mxu0 0
    %783 = vmatpush1.bf16.msra.mxu0 0
    %784 = vmatprep.subr.bf16.mxu0 0
    %785 = vmatpush1.bf16.msra.mxu0 0
    %786 = vmatprep.subr.bf16.mxu0 0
    %787 = vmatpush1.bf16.msra.mxu0 0
    %788 = vmatprep.subr.bf16.mxu0 0
    %789 = vmatpush1.bf16.msra.mxu0 0
    %790 = vmatprep.subr.bf16.mxu0 0
    %791 = vmatpush1.bf16.msra.mxu0 0
    %792 = vmatprep.mubr.bf16.mxu0 0
    %793 = vmatmul.mubr.bf16.gmra.mrb[0].mxu0 %v759
    %v794 = vpop.f32.mrb[0].mxu0
    %v795 = vadd.f32 0.0, %v794
    %v796 = vpop.f32.mrb[0].mxu0
    %v797 = vadd.f32 0.0, %v796
    %v798 = vpop.f32.mrb[0].mxu0
    %v799 = vpop.f32.mrb[0].mxu0
    %800 = vdwg.mxu0
    %801 = vmatprep.subr.bf16.mxu0 0
    %802 = vmatpush1.bf16.msra.mxu0 %v598
    %803 = vmatprep.subr.bf16.mxu0 0
    %804 = vmatpush1.bf16.msra.mxu0 %v601
    %805 = vmatprep.subr.bf16.mxu0 0
    %806 = vmatpush1.bf16.msra.mxu0 %v604
    %807 = vmatprep.subr.bf16.mxu0 0
    %808 = vmatpush1.bf16.msra.mxu0 %v607
    %809 = vmatprep.subr.bf16.mxu0 0
    %810 = vmatpush1.bf16.msra.mxu0 %v610
    %811 = vmatprep.subr.bf16.mxu0 0
    %812 = vmatpush1.bf16.msra.mxu0 %v613
    %813 = vmatprep.subr.bf16.mxu0 0
    %814 = vmatpush1.bf16.msra.mxu0 %v616
    %815 = vmatprep.subr.bf16.mxu0 0
    %816 = vmatpush1.bf16.msra.mxu0 %v619
    %817 = vmatprep.subr.bf16.mxu0 0
    %818 = vmatpush1.bf16.msra.mxu0 0
    %819 = vmatprep.subr.bf16.mxu0 0
    %820 = vmatpush1.bf16.msra.mxu0 0
    %821 = vmatprep.subr.bf16.mxu0 0
    %822 = vmatpush1.bf16.msra.mxu0 0
    %823 = vmatprep.subr.bf16.mxu0 0
    %824 = vmatpush1.bf16.msra.mxu0 0
    %825 = vmatprep.subr.bf16.mxu0 0
    %826 = vmatpush1.bf16.msra.mxu0 0
    %827 = vmatprep.subr.bf16.mxu0 0
    %828 = vmatpush1.bf16.msra.mxu0 0
    %829 = vmatprep.subr.bf16.mxu0 0
    %830 = vmatpush1.bf16.msra.mxu0 0
    %831 = vmatprep.subr.bf16.mxu0 0
    %832 = vmatpush1.bf16.msra.mxu0 0
    %833 = vmatprep.mubr.bf16.mxu0 0
    %834 = vmatmul.mubr.bf16.gmra.mrb[0].mxu0 %v759
    %v835 = vpop.f32.mrb[0].mxu0
    %v836 = vadd.f32 0.0, %v835
    %v837 = vpop.f32.mrb[0].mxu0
    %v838 = vpop.f32.mrb[0].mxu0
    %v839 = vpop.f32.mrb[0].mxu0
    %840 = vdwg.mxu0
    %v841 = vadd.f32 %v836, %v729
    %v842 = vadd.f32 %v756, %v795
    %v843 = vxor.u32 %v842, 2147483648
    %v844 = vmul.f32 %v843, 1.442695
    %v845 = vpow.pop %v844
    %v846 = vadd.f32 %v845, 1.0
    %v847 = vrcp.pop %v846
    %v848 = vmul.f32 1.0, %v847
    %v849 = vadd.f32 %v757, %v797
    %v850 = vxor.u32 %v849, 2147483648
    %v851 = vmul.f32 %v850, 1.442695
    %v852 = vpow.pop %v851
    %v853 = vadd.f32 %v852, 1.0
    %v854 = vrcp.pop %v853
    %v855 = vmul.f32 1.0, %v854
    %v856 = vmul.f32 %v848, %v841
    %v857 = vadd.f32 %v758, %v856
    %v858 = vtanh.pop %v857
    %v859 = vsub.f32 %v751, %v858
    %v860 = vmul.f32 %v855, %v859
    %v861 = vadd.f32 %v858, %v860
    %s862 = scalar_lea.vmem [#allocation14], 8
    %863 = vst [vmem:[%s862] sm:$0xff] %v861
    %s864 = smul.u32 2, 3
    %s865 = smul.addr %s864, 8
    %s866 = scalar_lea.vmem [#allocation2], %s865
    %v867 = vld [vmem:[%s866] sm:$0xff]
    %v868 = vld [vmem:[%s866 + $0x8] sm:$0xff]
    %v869 = vld [vmem:[%s866 + $0x10] sm:$0xff]
    %v870 = vpack.c.bf16 %v861, %v861
    %871 = vmatprep.subr.bf16.mxu0 %v597
    %872 = vmatpush1.bf16.msra.mxu0 %v596
    %873 = vmatprep.subr.bf16.mxu0 %v600
    %874 = vmatpush1.bf16.msra.mxu0 %v599
    %875 = vmatprep.subr.bf16.mxu0 %v603
    %876 = vmatpush1.bf16.msra.mxu0 %v602
    %877 = vmatprep.subr.bf16.mxu0 %v606
    %878 = vmatpush1.bf16.msra.mxu0 %v605
    %879 = vmatprep.subr.bf16.mxu0 %v609
    %880 = vmatpush1.bf16.msra.mxu0 %v608
    %881 = vmatprep.subr.bf16.mxu0 %v612
    %882 = vmatpush1.bf16.msra.mxu0 %v611
    %883 = vmatprep.subr.bf16.mxu0 %v615
    %884 = vmatpush1.bf16.msra.mxu0 %v614
    %885 = vmatprep.subr.bf16.mxu0 %v618
    %886 = vmatpush1.bf16.msra.mxu0 %v617
    %887 = vmatprep.subr.bf16.mxu0 0
    %888 = vmatpush1.bf16.msra.mxu0 0
    %889 = vmatprep.subr.bf16.mxu0 0
    %890 = vmatpush1.bf16.msra.mxu0 0
    %891 = vmatprep.subr.bf16.mxu0 0
    %892 = vmatpush1.bf16.msra.mxu0 0
    %893 = vmatprep.subr.bf16.mxu0 0
    %894 = vmatpush1.bf16.msra.mxu0 0
    %895 = vmatprep.subr.bf16.mxu0 0
    %896 = vmatpush1.bf16.msra.mxu0 0
    %897 = vmatprep.subr.bf16.mxu0 0
    %898 = vmatpush1.bf16.msra.mxu0 0
    %899 = vmatprep.subr.bf16.mxu0 0
    %900 = vmatpush1.bf16.msra.mxu0 0
    %901 = vmatprep.subr.bf16.mxu0 0
    %902 = vmatpush1.bf16.msra.mxu0 0
    %903 = vmatprep.mubr.bf16.mxu0 0
    %904 = vmatmul.mubr.bf16.gmra.mrb[0].mxu0 %v870
    %v905 = vpop.f32.mrb[0].mxu0
    %v906 = vadd.f32 0.0, %v905
    %v907 = vpop.f32.mrb[0].mxu0
    %v908 = vadd.f32 0.0, %v907
    %v909 = vpop.f32.mrb[0].mxu0
    %v910 = vpop.f32.mrb[0].mxu0
    %911 = vdwg.mxu0
    %912 = vmatprep.subr.bf16.mxu0 0
    %913 = vmatpush1.bf16.msra.mxu0 %v598
    %914 = vmatprep.subr.bf16.mxu0 0
    %915 = vmatpush1.bf16.msra.mxu0 %v601
    %916 = vmatprep.subr.bf16.mxu0 0
    %917 = vmatpush1.bf16.msra.mxu0 %v604
    %918 = vmatprep.subr.bf16.mxu0 0
    %919 = vmatpush1.bf16.msra.mxu0 %v607
    %920 = vmatprep.subr.bf16.mxu0 0
    %921 = vmatpush1.bf16.msra.mxu0 %v610
    %922 = vmatprep.subr.bf16.mxu0 0
    %923 = vmatpush1.bf16.msra.mxu0 %v613
    %924 = vmatprep.subr.bf16.mxu0 0
    %925 = vmatpush1.bf16.msra.mxu0 %v616
    %926 = vmatprep.subr.bf16.mxu0 0
    %927 = vmatpush1.bf16.msra.mxu0 %v619
    %928 = vmatprep.subr.bf16.mxu0 0
    %929 = vmatpush1.bf16.msra.mxu0 0
    %930 = vmatprep.subr.bf16.mxu0 0
    %931 = vmatpush1.bf16.msra.mxu0 0
    %932 = vmatprep.subr.bf16.mxu0 0
    %933 = vmatpush1.bf16.msra.mxu0 0
    %934 = vmatprep.subr.bf16.mxu0 0
    %935 = vmatpush1.bf16.msra.mxu0 0
    %936 = vmatprep.subr.bf16.mxu0 0
    %937 = vmatpush1.bf16.msra.mxu0 0
    %938 = vmatprep.subr.bf16.mxu0 0
    %939 = vmatpush1.bf16.msra.mxu0 0
    %940 = vmatprep.subr.bf16.mxu0 0
    %941 = vmatpush1.bf16.msra.mxu0 0
    %942 = vmatprep.subr.bf16.mxu0 0
    %943 = vmatpush1.bf16.msra.mxu0 0
    %944 = vmatprep.mubr.bf16.mxu0 0
    %945 = vmatmul.mubr.bf16.gmra.mrb[0].mxu0 %v870
    %v946 = vpop.f32.mrb[0].mxu0
    %v947 = vadd.f32 0.0, %v946
    %v948 = vpop.f32.mrb[0].mxu0
    %v949 = vpop.f32.mrb[0].mxu0
    %v950 = vpop.f32.mrb[0].mxu0
    %951 = vdwg.mxu0
    %v952 = vadd.f32 %v947, %v729
    %v953 = vadd.f32 %v867, %v906
    %v954 = vxor.u32 %v953, 2147483648
    %v955 = vmul.f32 %v954, 1.442695
    %v956 = vpow.pop %v955
    %v957 = vadd.f32 %v956, 1.0
    %v958 = vrcp.pop %v957
    %v959 = vmul.f32 1.0, %v958
    %v960 = vadd.f32 %v868, %v908
    %v961 = vxor.u32 %v960, 2147483648
    %v962 = vmul.f32 %v961, 1.442695
    %v963 = vpow.pop %v962
    %v964 = vadd.f32 %v963, 1.0
    %v965 = vrcp.pop %v964
    %v966 = vmul.f32 1.0, %v965
    %v967 = vmul.f32 %v959, %v952
    %v968 = vadd.f32 %v869, %v967
    %v969 = vtanh.pop %v968
    %v970 = vsub.f32 %v861, %v969
    %v971 = vmul.f32 %v966, %v970
    %v972 = vadd.f32 %v969, %v971
    %s973 = scalar_lea.vmem [#allocation14], 16
    %974 = vst [vmem:[%s973] sm:$0xff] %v972
    %s975 = smul.u32 3, 3
    %s976 = smul.addr %s975, 8
    %s977 = scalar_lea.vmem [#allocation2], %s976
    %v978 = vld [vmem:[%s977] sm:$0xff]
    %v979 = vld [vmem:[%s977 + $0x8] sm:$0xff]
    %v980 = vld [vmem:[%s977 + $0x10] sm:$0xff]
    %v981 = vpack.c.bf16 %v972, %v972
    %982 = vmatprep.subr.bf16.mxu0 %v597
    %983 = vmatpush1.bf16.msra.mxu0 %v596
    %984 = vmatprep.subr.bf16.mxu0 %v600
    %985 = vmatpush1.bf16.msra.mxu0 %v599
    %986 = vmatprep.subr.bf16.mxu0 %v603
    %987 = vmatpush1.bf16.msra.mxu0 %v602
    %988 = vmatprep.subr.bf16.mxu0 %v606
    %989 = vmatpush1.bf16.msra.mxu0 %v605
    %990 = vmatprep.subr.bf16.mxu0 %v609
    %991 = vmatpush1.bf16.msra.mxu0 %v608
    %992 = vmatprep.subr.bf16.mxu0 %v612
    %993 = vmatpush1.bf16.msra.mxu0 %v611
    %994 = vmatprep.subr.bf16.mxu0 %v615
    %995 = vmatpush1.bf16.msra.mxu0 %v614
    %996 = vmatprep.subr.bf16.mxu0 %v618
    %997 = vmatpush1.bf16.msra.mxu0 %v617
    %998 = vmatprep.subr.bf16.mxu0 0
    %999 = vmatpush1.bf16.msra.mxu0 0
    %1000 = vmatprep.subr.bf16.mxu0 0
    %1001 = vmatpush1.bf16.msra.mxu0 0
    %1002 = vmatprep.subr.bf16.mxu0 0
    %1003 = vmatpush1.bf16.msra.mxu0 0
    %1004 = vmatprep.subr.bf16.mxu0 0
    %1005 = vmatpush1.bf16.msra.mxu0 0
    %1006 = vmatprep.subr.bf16.mxu0 0
    %1007 = vmatpush1.bf16.msra.mxu0 0
    %1008 = vmatprep.subr.bf16.mxu0 0
    %1009 = vmatpush1.bf16.msra.mxu0 0
    %1010 = vmatprep.subr.bf16.mxu0 0
    %1011 = vmatpush1.bf16.msra.mxu0 0
    %1012 = vmatprep.subr.bf16.mxu0 0
    %1013 = vmatpush1.bf16.msra.mxu0 0
    %1014 = vmatprep.mubr.bf16.mxu0 0
    %1015 = vmatmul.mubr.bf16.gmra.mrb[0].mxu0 %v981
    %v1016 = vpop.f32.mrb[0].mxu0
    %v1017 = vadd.f32 0.0, %v1016
    %v1018 = vpop.f32.mrb[0].mxu0
    %v1019 = vadd.f32 0.0, %v1018
    %v1020 = vpop.f32.mrb[0].mxu0
    %v1021 = vpop.f32.mrb[0].mxu0
    %1022 = vdwg.mxu0
    %1023 = vmatprep.subr.bf16.mxu0 0
    %1024 = vmatpush1.bf16.msra.mxu0 %v598
    %1025 = vmatprep.subr.bf16.mxu0 0
    %1026 = vmatpush1.bf16.msra.mxu0 %v601
    %1027 = vmatprep.subr.bf16.mxu0 0
    %1028 = vmatpush1.bf16.msra.mxu0 %v604
    %1029 = vmatprep.subr.bf16.mxu0 0
    %1030 = vmatpush1.bf16.msra.mxu0 %v607
    %1031 = vmatprep.subr.bf16.mxu0 0
    %1032 = vmatpush1.bf16.msra.mxu0 %v610
    %1033 = vmatprep.subr.bf16.mxu0 0
    %1034 = vmatpush1.bf16.msra.mxu0 %v613
    %1035 = vmatprep.subr.bf16.mxu0 0
    %1036 = vmatpush1.bf16.msra.mxu0 %v616
    %1037 = vmatprep.subr.bf16.mxu0 0
    %1038 = vmatpush1.bf16.msra.mxu0 %v619
    %1039 = vmatprep.subr.bf16.mxu0 0
    %1040 = vmatpush1.bf16.msra.mxu0 0
    %1041 = vmatprep.subr.bf16.mxu0 0
    %1042 = vmatpush1.bf16.msra.mxu0 0
    %1043 = vmatprep.subr.bf16.mxu0 0
    %1044 = vmatpush1.bf16.msra.mxu0 0
    %1045 = vmatprep.subr.bf16.mxu0 0
    %1046 = vmatpush1.bf16.msra.mxu0 0
    %1047 = vmatprep.subr.bf16.mxu0 0
    %1048 = vmatpush1.bf16.msra.mxu0 0
    %1049 = vmatprep.subr.bf16.mxu0 0
    %1050 = vmatpush1.bf16.msra.mxu0 0
    %1051 = vmatprep.subr.bf16.mxu0 0
    %1052 = vmatpush1.bf16.msra.mxu0 0
    %1053 = vmatprep.subr.bf16.mxu0 0
    %1054 = vmatpush1.bf16.msra.mxu0 0
    %1055 = vmatprep.mubr.bf16.mxu0 0
    %1056 = vmatmul.mubr.bf16.gmra.mrb[0].mxu0 %v981
    %v1057 = vpop.f32.mrb[0].mxu0
    %v1058 = vadd.f32 0.0, %v1057
    %v1059 = vpop.f32.mrb[0].mxu0
    %v1060 = vpop.f32.mrb[0].mxu0
    %v1061 = vpop.f32.mrb[0].mxu0
    %1062 = vdwg.mxu0
    %v1063 = vadd.f32 %v1058, %v729
    %v1064 = vadd.f32 %v978, %v1017
    %v1065 = vxor.u32 %v1064, 2147483648
    %v1066 = vmul.f32 %v1065, 1.442695
    %v1067 = vpow.pop %v1066
    %v1068 = vadd.f32 %v1067, 1.0
    %v1069 = vrcp.pop %v1068
    %v1070 = vmul.f32 1.0, %v1069
    %v1071 = vadd.f32 %v979, %v1019
    %v1072 = vxor.u32 %v1071, 2147483648
    %v1073 = vmul.f32 %v1072, 1.442695
    %v1074 = vpow.pop %v1073
    %v1075 = vadd.f32 %v1074, 1.0
    %v1076 = vrcp.pop %v1075
    %v1077 = vmul.f32 1.0, %v1076
    %v1078 = vmul.f32 %v1070, %v1063
    %v1079 = vadd.f32 %v980, %v1078
    %v1080 = vtanh.pop %v1079
    %v1081 = vsub.f32 %v972, %v1080
    %v1082 = vmul.f32 %v1077, %v1081
    %v1083 = vadd.f32 %v1080, %v1082
    %s1084 = scalar_lea.vmem [#allocation14], 24
    %1085 = vst [vmem:[%s1084] sm:$0xff] %v1083
    %s1086 = smul.u32 4, 3
    %s1087 = smul.addr %s1086, 8
    %s1088 = scalar_lea.vmem [#allocation2], %s1087
    %v1089 = vld [vmem:[%s1088] sm:$0xff]
    %v1090 = vld [vmem:[%s1088 + $0x8] sm:$0xff]
    %v1091 = vld [vmem:[%s1088 + $0x10] sm:$0xff]
    %v1092 = vpack.c.bf16 %v1083, %v1083
    %1093 = vmatprep.subr.bf16.mxu0 %v597
    %1094 = vmatpush1.bf16.msra.mxu0 %v596
    %1095 = vmatprep.subr.bf16.mxu0 %v600
    %1096 = vmatpush1.bf16.msra.mxu0 %v599
    %1097 = vmatprep.subr.bf16.mxu0 %v603
    %1098 = vmatpush1.bf16.msra.mxu0 %v602
    %1099 = vmatprep.subr.bf16.mxu0 %v606
    %1100 = vmatpush1.bf16.msra.mxu0 %v605
    %1101 = vmatprep.subr.bf16.mxu0 %v609
    %1102 = vmatpush1.bf16.msra.mxu0 %v608
    %1103 = vmatprep.subr.bf16.mxu0 %v612
    %1104 = vmatpush1.bf16.msra.mxu0 %v611
    %1105 = vmatprep.subr.bf16.mxu0 %v615
    %1106 = vmatpush1.bf16.msra.mxu0 %v614
    %1107 = vmatprep.subr.bf16.mxu0 %v618
    %1108 = vmatpush1.bf16.msra.mxu0 %v617
    %1109 = vmatprep.subr.bf16.mxu0 0
    %1110 = vmatpush1.bf16.msra.mxu0 0
    %1111 = vmatprep.subr.bf16.mxu0 0
    %1112 = vmatpush1.bf16.msra.mxu0 0
    %1113 = vmatprep.subr.bf16.mxu0 0
    %1114 = vmatpush1.bf16.msra.mxu0 0
    %1115 = vmatprep.subr.bf16.mxu0 0
    %1116 = vmatpush1.bf16.msra.mxu0 0
    %1117 = vmatprep.subr.bf16.mxu0 0
    %1118 = vmatpush1.bf16.msra.mxu0 0
    %1119 = vmatprep.subr.bf16.mxu0 0
    %1120 = vmatpush1.bf16.msra.mxu0 0
    %1121 = vmatprep.subr.bf16.mxu0 0
    %1122 = vmatpush1.bf16.msra.mxu0 0
    %1123 = vmatprep.subr.bf16.mxu0 0
    %1124 = vmatpush1.bf16.msra.mxu0 0
    %1125 = vmatprep.mubr.bf16.mxu0 0
    %1126 = vmatmul.mubr.bf16.gmra.mrb[0].mxu0 %v1092
    %v1127 = vpop.f32.mrb[0].mxu0
    %v1128 = vadd.f32 0.0, %v1127
    %v1129 = vpop.f32.mrb[0].mxu0
    %v1130 = vadd.f32 0.0, %v1129
    %v1131 = vpop.f32.mrb[0].mxu0
    %v1132 = vpop.f32.mrb[0].mxu0
    %1133 = vdwg.mxu0
    %1134 = vmatprep.subr.bf16.mxu0 0
    %1135 = vmatpush1.bf16.msra.mxu0 %v598
    %1136 = vmatprep.subr.bf16.mxu0 0
    %1137 = vmatpush1.bf16.msra.mxu0 %v601
    %1138 = vmatprep.subr.bf16.mxu0 0
    %1139 = vmatpush1.bf16.msra.mxu0 %v604
    %1140 = vmatprep.subr.bf16.mxu0 0
    %1141 = vmatpush1.bf16.msra.mxu0 %v607
    %1142 = vmatprep.subr.bf16.mxu0 0
    %1143 = vmatpush1.bf16.msra.mxu0 %v610
    %1144 = vmatprep.subr.bf16.mxu0 0
    %1145 = vmatpush1.bf16.msra.mxu0 %v613
    %1146 = vmatprep.subr.bf16.mxu0 0
    %1147 = vmatpush1.bf16.msra.mxu0 %v616
    %1148 = vmatprep.subr.bf16.mxu0 0
    %1149 = vmatpush1.bf16.msra.mxu0 %v619
    %1150 = vmatprep.subr.bf16.mxu0 0
    %1151 = vmatpush1.bf16.msra.mxu0 0
    %1152 = vmatprep.subr.bf16.mxu0 0
    %1153 = vmatpush1.bf16.msra.mxu0 0
    %1154 = vmatprep.subr.bf16.mxu0 0
    %1155 = vmatpush1.bf16.msra.mxu0 0
    %1156 = vmatprep.subr.bf16.mxu0 0
    %1157 = vmatpush1.bf16.msra.mxu0 0
    %1158 = vmatprep.subr.bf16.mxu0 0
    %1159 = vmatpush1.bf16.msra.mxu0 0
    %1160 = vmatprep.subr.bf16.mxu0 0
    %1161 = vmatpush1.bf16.msra.mxu0 0
    %1162 = vmatprep.subr.bf16.mxu0 0
    %1163 = vmatpush1.bf16.msra.mxu0 0
    %1164 = vmatprep.subr.bf16.mxu0 0
    %1165 = vmatpush1.bf16.msra.mxu0 0
    %1166 = vmatprep.mubr.bf16.mxu0 0
    %1167 = vmatmul.mubr.bf16.gmra.mrb[0].mxu0 %v1092
    %v1168 = vpop.f32.mrb[0].mxu0
    %v1169 = vadd.f32 0.0, %v1168
    %v1170 = vpop.f32.mrb[0].mxu0
    %v1171 = vpop.f32.mrb[0].mxu0
    %v1172 = vpop.f32.mrb[0].mxu0
    %1173 = vdwg.mxu0
    %v1174 = vadd.f32 %v1169, %v729
    %v1175 = vadd.f32 %v1089, %v1128
    %v1176 = vxor.u32 %v1175, 2147483648
    %v1177 = vmul.f32 %v1176, 1.442695
    %v1178 = vpow.pop %v1177
    %v1179 = vadd.f32 %v1178, 1.0
    %v1180 = vrcp.pop %v1179
    %v1181 = vmul.f32 1.0, %v1180
    %v1182 = vadd.f32 %v1090, %v1130
    %v1183 = vxor.u32 %v1182, 2147483648
    %v1184 = vmul.f32 %v1183, 1.442695
    %v1185 = vpow.pop %v1184
    %v1186 = vadd.f32 %v1185, 1.0
    %v1187 = vrcp.pop %v1186
    %v1188 = vmul.f32 1.0, %v1187
    %v1189 = vmul.f32 %v1181, %v1174
    %v1190 = vadd.f32 %v1091, %v1189
    %v1191 = vtanh.pop %v1190
    %v1192 = vsub.f32 %v1083, %v1191
    %v1193 = vmul.f32 %v1188, %v1192
    %v1194 = vadd.f32 %v1191, %v1193
    %s1195 = scalar_lea.vmem [#allocation14], 32
    %1196 = vst [vmem:[%s1195] sm:$0xff] %v1194
    %s1197 = smul.u32 5, 3
    %s1198 = smul.addr %s1197, 8
    %s1199 = scalar_lea.vmem [#allocation2], %s1198
    %v1200 = vld [vmem:[%s1199] sm:$0xff]
    %v1201 = vld [vmem:[%s1199 + $0x8] sm:$0xff]
    %v1202 = vld [vmem:[%s1199 + $0x10] sm:$0xff]
    %v1203 = vpack.c.bf16 %v1194, %v1194
    %1204 = vmatprep.subr.bf16.mxu0 %v597
    %1205 = vmatpush1.bf16.msra.mxu0 %v596
    %1206 = vmatprep.subr.bf16.mxu0 %v600
    %1207 = vmatpush1.bf16.msra.mxu0 %v599
    %1208 = vmatprep.subr.bf16.mxu0 %v603
    %1209 = vmatpush1.bf16.msra.mxu0 %v602
    %1210 = vmatprep.subr.bf16.mxu0 %v606
    %1211 = vmatpush1.bf16.msra.mxu0 %v605
    %1212 = vmatprep.subr.bf16.mxu0 %v609
    %1213 = vmatpush1.bf16.msra.mxu0 %v608
    %1214 = vmatprep.subr.bf16.mxu0 %v612
    %1215 = vmatpush1.bf16.msra.mxu0 %v611
    %1216 = vmatprep.subr.bf16.mxu0 %v615
    %1217 = vmatpush1.bf16.msra.mxu0 %v614
    %1218 = vmatprep.subr.bf16.mxu0 %v618
    %1219 = vmatpush1.bf16.msra.mxu0 %v617
    %1220 = vmatprep.subr.bf16.mxu0 0
    %1221 = vmatpush1.bf16.msra.mxu0 0
    %1222 = vmatprep.subr.bf16.mxu0 0
    %1223 = vmatpush1.bf16.msra.mxu0 0
    %1224 = vmatprep.subr.bf16.mxu0 0
    %1225 = vmatpush1.bf16.msra.mxu0 0
    %1226 = vmatprep.subr.bf16.mxu0 0
    %1227 = vmatpush1.bf16.msra.mxu0 0
    %1228 = vmatprep.subr.bf16.mxu0 0
    %1229 = vmatpush1.bf16.msra.mxu0 0
    %1230 = vmatprep.subr.bf16.mxu0 0
    %1231 = vmatpush1.bf16.msra.mxu0 0
    %1232 = vmatprep.subr.bf16.mxu0 0
    %1233 = vmatpush1.bf16.msra.mxu0 0
    %1234 = vmatprep.subr.bf16.mxu0 0
    %1235 = vmatpush1.bf16.msra.mxu0 0
    %1236 = vmatprep.mubr.bf16.mxu0 0
    %1237 = vmatmul.mubr.bf16.gmra.mrb[0].mxu0 %v1203
    %v1238 = vpop.f32.mrb[0].mxu0
    %v1239 = vadd.f32 0.0, %v1238
    %v1240 = vpop.f32.mrb[0].mxu0
    %v1241 = vadd.f32 0.0, %v1240
    %v1242 = vpop.f32.mrb[0].mxu0
    %v1243 = vpop.f32.mrb[0].mxu0
    %1244 = vdwg.mxu0
    %1245 = vmatprep.subr.bf16.mxu0 0
    %1246 = vmatpush1.bf16.msra.mxu0 %v598
    %1247 = vmatprep.subr.bf16.mxu0 0
    %1248 = vmatpush1.bf16.msra.mxu0 %v601
    %1249 = vmatprep.subr.bf16.mxu0 0
    %1250 = vmatpush1.bf16.msra.mxu0 %v604
    %1251 = vmatprep.subr.bf16.mxu0 0
    %1252 = vmatpush1.bf16.msra.mxu0 %v607
    %1253 = vmatprep.subr.bf16.mxu0 0
    %1254 = vmatpush1.bf16.msra.mxu0 %v610
    %1255 = vmatprep.subr.bf16.mxu0 0
    %1256 = vmatpush1.bf16.msra.mxu0 %v613
    %1257 = vmatprep.subr.bf16.mxu0 0
    %1258 = vmatpush1.bf16.msra.mxu0 %v616
    %1259 = vmatprep.subr.bf16.mxu0 0
    %1260 = vmatpush1.bf16.msra.mxu0 %v619
    %1261 = vmatprep.subr.bf16.mxu0 0
    %1262 = vmatpush1.bf16.msra.mxu0 0
    %1263 = vmatprep.subr.bf16.mxu0 0
    %1264 = vmatpush1.bf16.msra.mxu0 0
    %1265 = vmatprep.subr.bf16.mxu0 0
    %1266 = vmatpush1.bf16.msra.mxu0 0
    %1267 = vmatprep.subr.bf16.mxu0 0
    %1268 = vmatpush1.bf16.msra.mxu0 0
    %1269 = vmatprep.subr.bf16.mxu0 0
    %1270 = vmatpush1.bf16.msra.mxu0 0
    %1271 = vmatprep.subr.bf16.mxu0 0
    %1272 = vmatpush1.bf16.msra.mxu0 0
    %1273 = vmatprep.subr.bf16.mxu0 0
    %1274 = vmatpush1.bf16.msra.mxu0 0
    %1275 = vmatprep.subr.bf16.mxu0 0
    %1276 = vmatpush1.bf16.msra.mxu0 0
    %1277 = vmatprep.mubr.bf16.mxu0 0
    %1278 = vmatmul.mubr.bf16.gmra.mrb[0].mxu0 %v1203
    %v1279 = vpop.f32.mrb[0].mxu0
    %v1280 = vadd.f32 0.0, %v1279
    %v1281 = vpop.f32.mrb[0].mxu0
    %v1282 = vpop.f32.mrb[0].mxu0
    %v1283 = vpop.f32.mrb[0].mxu0
    %1284 = vdwg.mxu0
    %v1285 = vadd.f32 %v1280, %v729
    %v1286 = vadd.f32 %v1200, %v1239
    %v1287 = vxor.u32 %v1286, 2147483648
    %v1288 = vmul.f32 %v1287, 1.442695
    %v1289 = vpow.pop %v1288
    %v1290 = vadd.f32 %v1289, 1.0
    %v1291 = vrcp.pop %v1290
    %v1292 = vmul.f32 1.0, %v1291
    %v1293 = vadd.f32 %v1201, %v1241
    %v1294 = vxor.u32 %v1293, 2147483648
    %v1295 = vmul.f32 %v1294, 1.442695
    %v1296 = vpow.pop %v1295
    %v1297 = vadd.f32 %v1296, 1.0
    %v1298 = vrcp.pop %v1297
    %v1299 = vmul.f32 1.0, %v1298
    %v1300 = vmul.f32 %v1292, %v1285
    %v1301 = vadd.f32 %v1202, %v1300
    %v1302 = vtanh.pop %v1301
    %v1303 = vsub.f32 %v1194, %v1302
    %v1304 = vmul.f32 %v1299, %v1303
    %v1305 = vadd.f32 %v1302, %v1304
    %s1306 = scalar_lea.vmem [#allocation14], 40
    %1307 = vst [vmem:[%s1306] sm:$0xff] %v1305
    %s1308 = smul.u32 6, 3
    %s1309 = smul.addr %s1308, 8
    %s1310 = scalar_lea.vmem [#allocation2], %s1309
    %v1311 = vld [vmem:[%s1310] sm:$0xff]
    %v1312 = vld [vmem:[%s1310 + $0x8] sm:$0xff]
    %v1313 = vld [vmem:[%s1310 + $0x10] sm:$0xff]
    %v1314 = vpack.c.bf16 %v1305, %v1305
    %1315 = vmatprep.subr.bf16.mxu0 %v597
    %1316 = vmatpush1.bf16.msra.mxu0 %v596
    %1317 = vmatprep.subr.bf16.mxu0 %v600
    %1318 = vmatpush1.bf16.msra.mxu0 %v599
    %1319 = vmatprep.subr.bf16.mxu0 %v603
    %1320 = vmatpush1.bf16.msra.mxu0 %v602
    %1321 = vmatprep.subr.bf16.mxu0 %v606
    %1322 = vmatpush1.bf16.msra.mxu0 %v605
    %1323 = vmatprep.subr.bf16.mxu0 %v609
    %1324 = vmatpush1.bf16.msra.mxu0 %v608
    %1325 = vmatprep.subr.bf16.mxu0 %v612
    %1326 = vmatpush1.bf16.msra.mxu0 %v611
    %1327 = vmatprep.subr.bf16.mxu0 %v615
    %1328 = vmatpush1.bf16.msra.mxu0 %v614
    %1329 = vmatprep.subr.bf16.mxu0 %v618
    %1330 = vmatpush1.bf16.msra.mxu0 %v617
    %1331 = vmatprep.subr.bf16.mxu0 0
    %1332 = vmatpush1.bf16.msra.mxu0 0
    %1333 = vmatprep.subr.bf16.mxu0 0
    %1334 = vmatpush1.bf16.msra.mxu0 0
    %1335 = vmatprep.subr.bf16.mxu0 0
    %1336 = vmatpush1.bf16.msra.mxu0 0
    %1337 = vmatprep.subr.bf16.mxu0 0
    %1338 = vmatpush1.bf16.msra.mxu0 0
    %1339 = vmatprep.subr.bf16.mxu0 0
    %1340 = vmatpush1.bf16.msra.mxu0 0
    %1341 = vmatprep.subr.bf16.mxu0 0
    %1342 = vmatpush1.bf16.msra.mxu0 0
    %1343 = vmatprep.subr.bf16.mxu0 0
    %1344 = vmatpush1.bf16.msra.mxu0 0
    %1345 = vmatprep.subr.bf16.mxu0 0
    %1346 = vmatpush1.bf16.msra.mxu0 0
    %1347 = vmatprep.mubr.bf16.mxu0 0
    %1348 = vmatmul.mubr.bf16.gmra.mrb[0].mxu0 %v1314
    %v1349 = vpop.f32.mrb[0].mxu0
    %v1350 = vadd.f32 0.0, %v1349
    %v1351 = vpop.f32.mrb[0].mxu0
    %v1352 = vadd.f32 0.0, %v1351
    %v1353 = vpop.f32.mrb[0].mxu0
    %v1354 = vpop.f32.mrb[0].mxu0
    %1355 = vdwg.mxu0
    %1356 = vmatprep.subr.bf16.mxu0 0
    %1357 = vmatpush1.bf16.msra.mxu0 %v598
    %1358 = vmatprep.subr.bf16.mxu0 0
    %1359 = vmatpush1.bf16.msra.mxu0 %v601
    %1360 = vmatprep.subr.bf16.mxu0 0
    %1361 = vmatpush1.bf16.msra.mxu0 %v604
    %1362 = vmatprep.subr.bf16.mxu0 0
    %1363 = vmatpush1.bf16.msra.mxu0 %v607
    %1364 = vmatprep.subr.bf16.mxu0 0
    %1365 = vmatpush1.bf16.msra.mxu0 %v610
    %1366 = vmatprep.subr.bf16.mxu0 0
    %1367 = vmatpush1.bf16.msra.mxu0 %v613
    %1368 = vmatprep.subr.bf16.mxu0 0
    %1369 = vmatpush1.bf16.msra.mxu0 %v616
    %1370 = vmatprep.subr.bf16.mxu0 0
    %1371 = vmatpush1.bf16.msra.mxu0 %v619
    %1372 = vmatprep.subr.bf16.mxu0 0
    %1373 = vmatpush1.bf16.msra.mxu0 0
    %1374 = vmatprep.subr.bf16.mxu0 0
    %1375 = vmatpush1.bf16.msra.mxu0 0
    %1376 = vmatprep.subr.bf16.mxu0 0
    %1377 = vmatpush1.bf16.msra.mxu0 0
    %1378 = vmatprep.subr.bf16.mxu0 0
    %1379 = vmatpush1.bf16.msra.mxu0 0
    %1380 = vmatprep.subr.bf16.mxu0 0
    %1381 = vmatpush1.bf16.msra.mxu0 0
    %1382 = vmatprep.subr.bf16.mxu0 0
    %1383 = vmatpush1.bf16.msra.mxu0 0
    %1384 = vmatprep.subr.bf16.mxu0 0
    %1385 = vmatpush1.bf16.msra.mxu0 0
    %1386 = vmatprep.subr.bf16.mxu0 0
    %1387 = vmatpush1.bf16.msra.mxu0 0
    %1388 = vmatprep.mubr.bf16.mxu0 0
    %1389 = vmatmul.mubr.bf16.gmra.mrb[0].mxu0 %v1314
    %v1390 = vpop.f32.mrb[0].mxu0
    %v1391 = vadd.f32 0.0, %v1390
    %v1392 = vpop.f32.mrb[0].mxu0
    %v1393 = vpop.f32.mrb[0].mxu0
    %v1394 = vpop.f32.mrb[0].mxu0
    %1395 = vdwg.mxu0
    %v1396 = vadd.f32 %v1391, %v729
    %v1397 = vadd.f32 %v1311, %v1350
    %v1398 = vxor.u32 %v1397, 2147483648
    %v1399 = vmul.f32 %v1398, 1.442695
    %v1400 = vpow.pop %v1399
    %v1401 = vadd.f32 %v1400, 1.0
    %v1402 = vrcp.pop %v1401
    %v1403 = vmul.f32 1.0, %v1402
    %v1404 = vadd.f32 %v1312, %v1352
    %v1405 = vxor.u32 %v1404, 2147483648
    %v1406 = vmul.f32 %v1405, 1.442695
    %v1407 = vpow.pop %v1406
    %v1408 = vadd.f32 %v1407, 1.0
    %v1409 = vrcp.pop %v1408
    %v1410 = vmul.f32 1.0, %v1409
    %v1411 = vmul.f32 %v1403, %v1396
    %v1412 = vadd.f32 %v1313, %v1411
    %v1413 = vtanh.pop %v1412
    %v1414 = vsub.f32 %v1305, %v1413
    %v1415 = vmul.f32 %v1410, %v1414
    %v1416 = vadd.f32 %v1413, %v1415
    %s1417 = scalar_lea.vmem [#allocation14], 48
    %1418 = vst [vmem:[%s1417] sm:$0xff] %v1416
    %s1419 = smul.u32 7, 3
    %s1420 = smul.addr %s1419, 8
    %s1421 = scalar_lea.vmem [#allocation2], %s1420
    %v1422 = vld [vmem:[%s1421] sm:$0xff]
    %v1423 = vld [vmem:[%s1421 + $0x8] sm:$0xff]
    %v1424 = vld [vmem:[%s1421 + $0x10] sm:$0xff]
    %v1425 = vpack.c.bf16 %v1416, %v1416
    %1426 = vmatprep.subr.bf16.mxu0 %v597
    %1427 = vmatpush1.bf16.msra.mxu0 %v596
    %1428 = vmatprep.subr.bf16.mxu0 %v600
    %1429 = vmatpush1.bf16.msra.mxu0 %v599
    %1430 = vmatprep.subr.bf16.mxu0 %v603
    %1431 = vmatpush1.bf16.msra.mxu0 %v602
    %1432 = vmatprep.subr.bf16.mxu0 %v606
    %1433 = vmatpush1.bf16.msra.mxu0 %v605
    %1434 = vmatprep.subr.bf16.mxu0 %v609
    %1435 = vmatpush1.bf16.msra.mxu0 %v608
    %1436 = vmatprep.subr.bf16.mxu0 %v612
    %1437 = vmatpush1.bf16.msra.mxu0 %v611
    %1438 = vmatprep.subr.bf16.mxu0 %v615
    %1439 = vmatpush1.bf16.msra.mxu0 %v614
    %1440 = vmatprep.subr.bf16.mxu0 %v618
    %1441 = vmatpush1.bf16.msra.mxu0 %v617
    %1442 = vmatprep.subr.bf16.mxu0 0
    %1443 = vmatpush1.bf16.msra.mxu0 0
    %1444 = vmatprep.subr.bf16.mxu0 0
    %1445 = vmatpush1.bf16.msra.mxu0 0
    %1446 = vmatprep.subr.bf16.mxu0 0
    %1447 = vmatpush1.bf16.msra.mxu0 0
    %1448 = vmatprep.subr.bf16.mxu0 0
    %1449 = vmatpush1.bf16.msra.mxu0 0
    %1450 = vmatprep.subr.bf16.mxu0 0
    %1451 = vmatpush1.bf16.msra.mxu0 0
    %1452 = vmatprep.subr.bf16.mxu0 0
    %1453 = vmatpush1.bf16.msra.mxu0 0
    %1454 = vmatprep.subr.bf16.mxu0 0
    %1455 = vmatpush1.bf16.msra.mxu0 0
    %1456 = vmatprep.subr.bf16.mxu0 0
    %1457 = vmatpush1.bf16.msra.mxu0 0
    %1458 = vmatprep.mubr.bf16.mxu0 0
    %1459 = vmatmul.mubr.bf16.gmra.mrb[0].mxu0 %v1425
    %v1460 = vpop.f32.mrb[0].mxu0
    %v1461 = vadd.f32 0.0, %v1460
    %v1462 = vpop.f32.mrb[0].mxu0
    %v1463 = vadd.f32 0.0, %v1462
    %v1464 = vpop.f32.mrb[0].mxu0
    %v1465 = vpop.f32.mrb[0].mxu0
    %1466 = vdwg.mxu0
    %1467 = vmatprep.subr.bf16.mxu0 0
    %1468 = vmatpush1.bf16.msra.mxu0 %v598
    %1469 = vmatprep.subr.bf16.mxu0 0
    %1470 = vmatpush1.bf16.msra.mxu0 %v601
    %1471 = vmatprep.subr.bf16.mxu0 0
    %1472 = vmatpush1.bf16.msra.mxu0 %v604
    %1473 = vmatprep.subr.bf16.mxu0 0
    %1474 = vmatpush1.bf16.msra.mxu0 %v607
    %1475 = vmatprep.subr.bf16.mxu0 0
    %1476 = vmatpush1.bf16.msra.mxu0 %v610
    %1477 = vmatprep.subr.bf16.mxu0 0
    %1478 = vmatpush1.bf16.msra.mxu0 %v613
    %1479 = vmatprep.subr.bf16.mxu0 0
    %1480 = vmatpush1.bf16.msra.mxu0 %v616
    %1481 = vmatprep.subr.bf16.mxu0 0
    %1482 = vmatpush1.bf16.msra.mxu0 %v619
    %1483 = vmatprep.subr.bf16.mxu0 0
    %1484 = vmatpush1.bf16.msra.mxu0 0
    %1485 = vmatprep.subr.bf16.mxu0 0
    %1486 = vmatpush1.bf16.msra.mxu0 0
    %1487 = vmatprep.subr.bf16.mxu0 0
    %1488 = vmatpush1.bf16.msra.mxu0 0
    %1489 = vmatprep.subr.bf16.mxu0 0
    %1490 = vmatpush1.bf16.msra.mxu0 0
    %1491 = vmatprep.subr.bf16.mxu0 0
    %1492 = vmatpush1.bf16.msra.mxu0 0
    %1493 = vmatprep.subr.bf16.mxu0 0
    %1494 = vmatpush1.bf16.msra.mxu0 0
    %1495 = vmatprep.subr.bf16.mxu0 0
    %1496 = vmatpush1.bf16.msra.mxu0 0
    %1497 = vmatprep.subr.bf16.mxu0 0
    %1498 = vmatpush1.bf16.msra.mxu0 0
    %1499 = vmatprep.mubr.bf16.mxu0 0
    %1500 = vmatmul.mubr.bf16.gmra.mrb[0].mxu0 %v1425
    %v1501 = vpop.f32.mrb[0].mxu0
    %v1502 = vadd.f32 0.0, %v1501
    %v1503 = vpop.f32.mrb[0].mxu0
    %v1504 = vpop.f32.mrb[0].mxu0
    %v1505 = vpop.f32.mrb[0].mxu0
    %1506 = vdwg.mxu0
    %v1507 = vadd.f32 %v1502, %v729
    %v1508 = vadd.f32 %v1422, %v1461
    %v1509 = vxor.u32 %v1508, 2147483648
    %v1510 = vmul.f32 %v1509, 1.442695
    %v1511 = vpow.pop %v1510
    %v1512 = vadd.f32 %v1511, 1.0
    %v1513 = vrcp.pop %v1512
    %v1514 = vmul.f32 1.0, %v1513
    %v1515 = vadd.f32 %v1423, %v1463
    %v1516 = vxor.u32 %v1515, 2147483648
    %v1517 = vmul.f32 %v1516, 1.442695
    %v1518 = vpow.pop %v1517
    %v1519 = vadd.f32 %v1518, 1.0
    %v1520 = vrcp.pop %v1519
    %v1521 = vmul.f32 1.0, %v1520
    %v1522 = vmul.f32 %v1514, %v1507
    %v1523 = vadd.f32 %v1424, %v1522
    %v1524 = vtanh.pop %v1523
    %v1525 = vsub.f32 %v1416, %v1524
    %v1526 = vmul.f32 %v1521, %v1525
    %v1527 = vadd.f32 %v1524, %v1526
    %s1528 = scalar_lea.vmem [#allocation14], 56
    %1529 = vst [vmem:[%s1528] sm:$0xff] %v1527
    %1530 = vst [vmem:[#allocation15] sm:$0xff] %v1527
    // Predicated region
    $region50: #{tpu_custom_call.1} parent=1 // pred_check
      _
    $region51: #{tpu_custom_call.1} parent=1 // pred_check_branch
      %1532 = sbr.rel (0) target = $region53
    $region52: #{tpu_custom_call.1} parent=1 // pred_region
      %s1534 = ssub.s32 1024, 1024
      %1535 = vsyncadd [#allocation5], %s1534
      %s1536 = sshll.u32 [#allocation14], 4
      %s1537 = int_to_ptr.vmem [resolvable:$true] %s1536
      %1542 = dma.vmem_to_hbm [thread:$0]  %s1537, 1024, %s6, [#allocation5], 128, 128, 8
    $region53: #{tpu_custom_call.1} parent=1 // pred_fallthru
      _
    // Predicated region
    $region54: #{tpu_custom_call.1} parent=1 // pred_check
      _
    $region55: #{tpu_custom_call.1} parent=1 // pred_check_branch
      %1544 = sbr.rel (0) target = $region57
    $region56: #{tpu_custom_call.1} parent=1 // pred_region
      %s1546 = ssub.s32 128, 128
      %1547 = vsyncadd [#allocation16], %s1546
      %s1549 = sshll.u32 [#allocation15], 4
      %s1550 = int_to_ptr.vmem [resolvable:$true] %s1549
      %1552 = dma.vmem_to_hbm [thread:$0]  %s1550, 128, %s7, [#allocation16]
    $region57: #{tpu_custom_call.1} parent=1 // pred_fallthru
      _
    // Predicated region
    $region58: #{tpu_custom_call.1} parent=1 // pred_check
      _
    $region59: #{tpu_custom_call.1} parent=1 // pred_check_branch
      %1554 = sbr.rel (0) target = $region61
    $region60: #{tpu_custom_call.1} parent=1 // pred_region
      %1555 = dma.done [#allocation5], 1024
    $region61: #{tpu_custom_call.1} parent=1 // pred_fallthru
      _
    // Predicated region
    $region62: #{tpu_custom_call.1} parent=1 // pred_check
      _
    $region63: #{tpu_custom_call.1} parent=1 // pred_check_branch
      %1557 = sbr.rel (0) target = $region65
    $region64: #{tpu_custom_call.1} parent=1 // pred_region
      %1558 = dma.done [#allocation16], 128
    $region65: #{tpu_custom_call.1} parent=1 // pred_fallthru
      _
    %1559 = vsyncpa [#allocation4], 1
    %1560 = vsyncpa [#allocation7], 1
    %1561 = vsyncpa [#allocation10], 1
    %1562 = vsyncpa [#allocation13], 1
    %1563 = vsyncpa [#allocation5], 1
    %1564 = vsyncpa [#allocation16], 1

</llo_original>
